<compile_context>
chip_gen: v7x
topology: tpu7x:2x2x1
jax: 0.10.0
libtpu: 0.0.40
codegen_flags: <defaults>
</compile_context>

<pallas_src>
import functools

import numpy as np
import jax
import jax.numpy as jnp
from jax import lax
from jax.experimental import pallas as pl
from jax.experimental.pallas import tpu as pltpu


# ---------------------------------------------------------------------------
# Helpers
# ---------------------------------------------------------------------------
def _h_allreduce(z, H, W, op):
    """z: (1, H*W), tokens laid out h-major on the lane axis.

    Returns, at every position (h, w), the reduction of z over all h for that w
    (replicated along h).  Rolls by multiples of W stay inside each w-coset, so a
    log2(H) doubling tree (power-of-two H) or H-1 linear steps give the exact
    per-column reduction; wrap-around lands back inside the same coset.
    """
    if H & (H - 1) == 0:                       # power of two: log2(H) doubling steps
        r = z
        s = W
        while s < H * W:
            r = op(r, pltpu.roll(r, s, axis=1))
            s *= 2
        return r
    r = z                                      # generic H: H-1 linear steps
    for k in range(1, H):
        r = op(r, pltpu.roll(z, k * W, axis=1))
    return r


# ---------------------------------------------------------------------------
# Fused kernel: 3x3 conv + ReLU + 1x1 neck + ReLU + classify/mask heads +
# class log_softmax + height softmax.  One image (all H*W tokens) per grid step.
# Layout: channels on sublanes, tokens (h-major) on the lane axis.
# ---------------------------------------------------------------------------
def _fused_ctc2d_kernel(x_ref, tap_ref, wbb_ref, bbb_ref, wnk_ref, bnk_ref,
                        wcls_ref, bcls_ref, wmsk_ref, bmsk_ref,
                        cls_ref, msk_ref, *, H, W):
    HW = H * W
    cmid = bbb_ref.shape[0]
    x = x_ref[...]                                        # (Cin, HW) f32

    # ---- backbone: 3x3 conv (padding=1) as 9 shifted taps + ReLU ----------------
    # For tap (dh, dw) we need x at token t + dh*W + dw, i.e. roll by -(dh*W + dw).
    # Wrapped / out-of-image lanes are exactly the lanes zeroed by tap_ref[k].
    acc = jnp.zeros((cmid, HW), jnp.float32)
    k = 0
    for dh in (-1, 0, 1):
        for dw in (-1, 0, 1):
            shift = (-(dh * W + dw)) % HW
            xs = x if shift == 0 else pltpu.roll(x, shift, axis=1)
            xs = xs * tap_ref[k]                          # (Cin, HW) * (1, HW)
            acc = acc + jnp.dot(wbb_ref[k], xs.astype(jnp.bfloat16),
                                preferred_element_type=jnp.float32)
            k += 1
    feat = jnp.maximum(acc + bbb_ref[...], 0.0)           # (Cmid, HW) f32

    # ---- neck: 1x1 conv + ReLU (never leaves VMEM) -------------------------------
    feat = jnp.dot(wnk_ref[...], feat.astype(jnp.bfloat16),
                   preferred_element_type=jnp.float32)
    feat = jnp.maximum(feat + bnk_ref[...], 0.0)
    featb = feat.astype(jnp.bfloat16)

    # ---- classify head: 1x1 conv + log_softmax over classes (sublane axis) -------
    cls = jnp.dot(wcls_ref[...], featb, preferred_element_type=jnp.float32)
    cls = cls + bcls_ref[...]                              # (Ncls, HW) f32
    m = jnp.max(cls, axis=0, keepdims=True)
    e = jnp.exp(cls - m)
    lse = jnp.log(jnp.sum(e, axis=0, keepdims=True))
    cls_ref[...] = (cls - m - lse).astype(cls_ref.dtype)   # bf16 log-probs

    # ---- mask head: 1x1 conv + softmax over H (strided lane all-reduce) ----------
    z = jnp.dot(wmsk_ref[...], featb, preferred_element_type=jnp.float32)
    z = z + bmsk_ref[...]                                  # (1, HW) f32
    zmax = _h_allreduce(z, H, W, jnp.maximum)
    pe = jnp.exp(z - zmax)
    psum = _h_allreduce(pe, H, W, jnp.add)
    msk_ref[...] = pe / psum


def ctc2d_forward_test(params, img):
    """forward(data, return_loss=False): extract_feat (backbone + neck) then 2D-CTC head."""
    B, cin, H, W = img.shape
    HW = H * W
    cmid = params['bb_w'].shape[0]
    ncls = params['cls_w'].shape[0]
    assert params['bb_w'].shape[2:] == (3, 3)

    x = img.reshape(B, cin, HW)                                     # f32, free reshape

    # Boundary-validity mask for each of the 9 taps -- a compile-time constant that
    # also masks the lanes contaminated by the in-kernel roll wrap-around.
    hh = np.repeat(np.arange(H), W)
    ww = np.tile(np.arange(W), H)
    taps = []
    for dh in (-1, 0, 1):
        for dw in (-1, 0, 1):
            ok = ((hh + dh >= 0) & (hh + dh < H) & (ww + dw >= 0) & (ww + dw < W))
            taps.append(ok.astype(np.float32))
    tap_mask = jnp.asarray(np.stack(taps, 0)[:, None, :])            # (9, 1, HW)

    # Weights in feature-major layout (channels on sublanes, tokens on lanes).
    wbb = params['bb_w'].transpose(2, 3, 0, 1).reshape(9, cmid, cin)
    wbb = wbb.astype(jnp.bfloat16)                                   # (9, Cmid, Cin), tap-major
    bbb = params['bb_b'][:, None]                                    # (Cmid, 1) f32
    wnk = params['neck_w'][:, :, 0, 0].astype(jnp.bfloat16)          # (Cmid, Cmid)
    bnk = params['neck_b'][:, None]
    wcls = params['cls_w'][:, :, 0, 0].astype(jnp.bfloat16)          # (Ncls, Cmid)
    bcls = params['cls_b'][:, None]
    wmsk = params['mask_w'][:, :, 0, 0].astype(jnp.bfloat16)         # (1, Cmid)
    bmsk = params['mask_b'][:, None]

    kern = functools.partial(_fused_ctc2d_kernel, H=H, W=W)
    cls_out, msk_out = pl.pallas_call(
        kern,
        out_shape=(jax.ShapeDtypeStruct((B, ncls, HW), jnp.bfloat16),
                   jax.ShapeDtypeStruct((B, 1, HW), jnp.float32)),
        grid_spec=pltpu.PrefetchScalarGridSpec(
            num_scalar_prefetch=0,
            # One image per grid step; B >= 2 gives the two v7x TensorCores work.
            grid=(B,),
            in_specs=[
                pl.BlockSpec((None, cin, HW), lambda b: (b, 0, 0)),
                pl.BlockSpec((9, 1, HW), lambda b: (0, 0, 0)),
                pl.BlockSpec((9, cmid, cin), lambda b: (0, 0, 0)),
                pl.BlockSpec((cmid, 1), lambda b: (0, 0)),
                pl.BlockSpec((cmid, cmid), lambda b: (0, 0)),
                pl.BlockSpec((cmid, 1), lambda b: (0, 0)),
                pl.BlockSpec((ncls, cmid), lambda b: (0, 0)),
                pl.BlockSpec((ncls, 1), lambda b: (0, 0)),
                pl.BlockSpec((1, cmid), lambda b: (0, 0)),
                pl.BlockSpec((1, 1), lambda b: (0, 0)),
            ],
            out_specs=[
                pl.BlockSpec((None, ncls, HW), lambda b: (b, 0, 0)),
                pl.BlockSpec((None, 1, HW), lambda b: (b, 0, 0)),
            ],
        ),
        compiler_params=pltpu.CompilerParams(
            dimension_semantics=("parallel",),
            vmem_limit_bytes=32 * 1024 * 1024,
        ),
    )(x, tap_mask, wbb, bbb, wnk, bnk, wcls, bcls, wmsk, bmsk)

    # Outputs already in (B, C, H*W) order: these reshapes are free (no transpose).
    classify = cls_out.reshape(B, ncls, H, W)
    mask = msk_out.reshape(B, H, W)
    return mask, classify


# ---------------------------------------------------------------------------
# Parameter init + pure-JAX reference for correctness checking
# ---------------------------------------------------------------------------
def init_params(key, cin=4, cmid=32, num_classes=10):
    ks = jax.random.split(key, 8)
    s = 0.1
    return dict(
        bb_w=jax.random.normal(ks[0], (cmid, cin, 3, 3), jnp.float32) * s,
        bb_b=jax.random.normal(ks[1], (cmid,), jnp.float32) * s,
        neck_w=jax.random.normal(ks[2], (cmid, cmid, 1, 1), jnp.float32) * s,
        neck_b=jax.random.normal(ks[3], (cmid,), jnp.float32) * s,
        cls_w=jax.random.normal(ks[4], (num_classes, cmid, 1, 1), jnp.float32) * s,
        cls_b=jax.random.normal(ks[5], (num_classes,), jnp.float32) * s,
        mask_w=jax.random.normal(ks[6], (1, cmid, 1, 1), jnp.float32) * s,
        mask_b=jax.random.normal(ks[7], (1,), jnp.float32) * s,
    )


def ref_forward(params, img):
    x = lax.conv_general_dilated(
        img, params['bb_w'], (1, 1), 'SAME',
        dimension_numbers=('NCHW', 'OIHW', 'NCHW'))
    x = jnp.maximum(x + params['bb_b'][None, :, None, None], 0.0)
    x = jnp.einsum('bchw,oc->bohw', x, params['neck_w'][:, :, 0, 0])
    x = jnp.maximum(x + params['neck_b'][None, :, None, None], 0.0)
    cls = jnp.einsum('bchw,oc->bohw', x, params['cls_w'][:, :, 0, 0])
    cls = cls + params['cls_b'][None, :, None, None]
    classify = jax.nn.log_softmax(cls, axis=1)
    m = jnp.einsum('bchw,oc->bohw', x, params['mask_w'][:, :, 0, 0])
    m = m + params['mask_b'][None, :, None, None]
    mask = jax.nn.softmax(m[:, 0], axis=1)   # softmax over H
    return mask, classify


if __name__ == "__main__":
    key = jax.random.PRNGKey(0)
    pkey, xkey = jax.random.split(key)
    params = init_params(pkey)
    img = jax.random.normal(xkey, (2, 4, 16, 16), jnp.float32)  # NCHW

    mask, classify = jax.jit(ctc2d_forward_test)(params, img)
    jax.block_until_ready((mask, classify))

    mask_ref, classify_ref = ref_forward(params, img)
    assert mask.shape == (2, 16, 16) and classify.shape == (2, 10, 16, 16)
    assert jnp.allclose(mask, mask_ref, atol=2e-2, rtol=2e-2)
    assert jnp.allclose(classify.astype(jnp.float32), classify_ref, atol=2e-2, rtol=2e-2)

    print("KERNEL_OK")
</pallas_src>

<mosaic_0001>
module attributes {stable_mosaic.version = 11 : i64} {
  func.func @_fused_ctc2d_kernel(%arg0: i32, %arg1: memref<1x4x256xf32, #tpu.memory_space<vmem>>, %arg2: memref<9x1x256xf32, #tpu.memory_space<vmem>>, %arg3: memref<9x32x4xbf16, #tpu.memory_space<vmem>>, %arg4: memref<32x1xf32, #tpu.memory_space<vmem>>, %arg5: memref<32x32xbf16, #tpu.memory_space<vmem>>, %arg6: memref<32x1xf32, #tpu.memory_space<vmem>>, %arg7: memref<10x32xbf16, #tpu.memory_space<vmem>>, %arg8: memref<10x1xf32, #tpu.memory_space<vmem>>, %arg9: memref<1x32xbf16, #tpu.memory_space<vmem>>, %arg10: memref<1x1xf32, #tpu.memory_space<vmem>>, %arg11: memref<1x10x256xbf16, #tpu.memory_space<vmem>>, %arg12: memref<1x1x256xf32, #tpu.memory_space<vmem>>) attributes {dimension_semantics = [#tpu.dimension_semantics<parallel>], iteration_bounds = array<i64: 2>, scalar_prefetch = 0 : i64, scratch_operands = 0 : i64, tpu.core_type = #tpu.core_type<tc>, window_params = [{transform_indices = @transform_0, window_bounds = array<i64: 1, 4, 256>}, {pipeline_mode = #tpu.pipeline_mode<synchronous>, transform_indices = @transform_1, window_bounds = array<i64: 9, 1, 256>}, {pipeline_mode = #tpu.pipeline_mode<synchronous>, transform_indices = @transform_2, window_bounds = array<i64: 9, 32, 4>}, {pipeline_mode = #tpu.pipeline_mode<synchronous>, transform_indices = @transform_3, window_bounds = array<i64: 32, 1>}, {pipeline_mode = #tpu.pipeline_mode<synchronous>, transform_indices = @transform_4, window_bounds = array<i64: 32, 32>}, {pipeline_mode = #tpu.pipeline_mode<synchronous>, transform_indices = @transform_5, window_bounds = array<i64: 32, 1>}, {pipeline_mode = #tpu.pipeline_mode<synchronous>, transform_indices = @transform_6, window_bounds = array<i64: 10, 32>}, {pipeline_mode = #tpu.pipeline_mode<synchronous>, transform_indices = @transform_7, window_bounds = array<i64: 10, 1>}, {pipeline_mode = #tpu.pipeline_mode<synchronous>, transform_indices = @transform_8, window_bounds = array<i64: 1, 32>}, {pipeline_mode = #tpu.pipeline_mode<synchronous>, transform_indices = @transform_9, window_bounds = array<i64: 1, 1>}, {transform_indices = @transform_10, window_bounds = array<i64: 1, 10, 256>}, {transform_indices = @transform_11, window_bounds = array<i64: 1, 1, 256>}]} {
    %c0 = arith.constant 0 : index
    %c0_0 = arith.constant 0 : index
    %c0_1 = arith.constant 0 : index
    %0 = vector.load %arg1[%c0, %c0_0, %c0_1] : memref<1x4x256xf32, #tpu.memory_space<vmem>>, vector<1x4x256xf32>
    %1 = vector.shape_cast %0 : vector<1x4x256xf32> to vector<4x256xf32>
    %cst = arith.constant 0.000000e+00 : f32
    %2 = vector.broadcast %cst : f32 to vector<32x256xf32>
    %c17_i32 = arith.constant 17 : i32
    %3 = tpu.dynamic_rotate %1 by %c17_i32 dim 1 : vector<4x256xf32>, i32 -> vector<4x256xf32>
    %c0_2 = arith.constant 0 : index
    %c0_3 = arith.constant 0 : index
    %c0_4 = arith.constant 0 : index
    %4 = vector.load %arg2[%c0_2, %c0_3, %c0_4] : memref<9x1x256xf32, #tpu.memory_space<vmem>>, vector<1x1x256xf32>
    %5 = vector.shape_cast %4 : vector<1x1x256xf32> to vector<1x256xf32>
    %6 = vector.broadcast %5 : vector<1x256xf32> to vector<4x256xf32>
    %7 = arith.mulf %3, %6 : vector<4x256xf32>
    %c0_5 = arith.constant 0 : index
    %c0_6 = arith.constant 0 : index
    %c0_7 = arith.constant 0 : index
    %8 = vector.load %arg3[%c0_5, %c0_6, %c0_7] : memref<9x32x4xbf16, #tpu.memory_space<vmem>>, vector<1x32x4xbf16>
    %9 = vector.shape_cast %8 : vector<1x32x4xbf16> to vector<32x4xbf16>
    %10 = arith.truncf %7 : vector<4x256xf32> to vector<4x256xbf16>
    %cst_8 = arith.constant dense<0.000000e+00> : vector<32x256xf32>
    %11 = tpu.matmul %9, %10, %cst_8 {dimension_numbers = #tpu.dot_dimension_numbers<[1], [0], [0], [1], [0, 0, 1, 1], [], []>} : vector<32x4xbf16>, vector<4x256xbf16>, vector<32x256xf32> -> vector<32x256xf32>
    %12 = arith.addf %2, %11 : vector<32x256xf32>
    %c16_i32 = arith.constant 16 : i32
    %13 = tpu.dynamic_rotate %1 by %c16_i32 dim 1 : vector<4x256xf32>, i32 -> vector<4x256xf32>
    %c1 = arith.constant 1 : index
    %c0_9 = arith.constant 0 : index
    %c0_10 = arith.constant 0 : index
    %14 = vector.load %arg2[%c1, %c0_9, %c0_10] : memref<9x1x256xf32, #tpu.memory_space<vmem>>, vector<1x1x256xf32>
    %15 = vector.shape_cast %14 : vector<1x1x256xf32> to vector<1x256xf32>
    %16 = vector.broadcast %15 : vector<1x256xf32> to vector<4x256xf32>
    %17 = arith.mulf %13, %16 : vector<4x256xf32>
    %c1_11 = arith.constant 1 : index
    %c0_12 = arith.constant 0 : index
    %c0_13 = arith.constant 0 : index
    %18 = vector.load %arg3[%c1_11, %c0_12, %c0_13] : memref<9x32x4xbf16, #tpu.memory_space<vmem>>, vector<1x32x4xbf16>
    %19 = vector.shape_cast %18 : vector<1x32x4xbf16> to vector<32x4xbf16>
    %20 = arith.truncf %17 : vector<4x256xf32> to vector<4x256xbf16>
    %cst_14 = arith.constant dense<0.000000e+00> : vector<32x256xf32>
    %21 = tpu.matmul %19, %20, %cst_14 {dimension_numbers = #tpu.dot_dimension_numbers<[1], [0], [0], [1], [0, 0, 1, 1], [], []>} : vector<32x4xbf16>, vector<4x256xbf16>, vector<32x256xf32> -> vector<32x256xf32>
    %22 = arith.addf %12, %21 : vector<32x256xf32>
    %c15_i32 = arith.constant 15 : i32
    %23 = tpu.dynamic_rotate %1 by %c15_i32 dim 1 : vector<4x256xf32>, i32 -> vector<4x256xf32>
    %c2 = arith.constant 2 : index
    %c0_15 = arith.constant 0 : index
    %c0_16 = arith.constant 0 : index
    %24 = vector.load %arg2[%c2, %c0_15, %c0_16] : memref<9x1x256xf32, #tpu.memory_space<vmem>>, vector<1x1x256xf32>
    %25 = vector.shape_cast %24 : vector<1x1x256xf32> to vector<1x256xf32>
    %26 = vector.broadcast %25 : vector<1x256xf32> to vector<4x256xf32>
    %27 = arith.mulf %23, %26 : vector<4x256xf32>
    %c2_17 = arith.constant 2 : index
    %c0_18 = arith.constant 0 : index
    %c0_19 = arith.constant 0 : index
    %28 = vector.load %arg3[%c2_17, %c0_18, %c0_19] : memref<9x32x4xbf16, #tpu.memory_space<vmem>>, vector<1x32x4xbf16>
    %29 = vector.shape_cast %28 : vector<1x32x4xbf16> to vector<32x4xbf16>
    %30 = arith.truncf %27 : vector<4x256xf32> to vector<4x256xbf16>
    %cst_20 = arith.constant dense<0.000000e+00> : vector<32x256xf32>
    %31 = tpu.matmul %29, %30, %cst_20 {dimension_numbers = #tpu.dot_dimension_numbers<[1], [0], [0], [1], [0, 0, 1, 1], [], []>} : vector<32x4xbf16>, vector<4x256xbf16>, vector<32x256xf32> -> vector<32x256xf32>
    %32 = arith.addf %22, %31 : vector<32x256xf32>
    %c1_i32 = arith.constant 1 : i32
    %33 = tpu.dynamic_rotate %1 by %c1_i32 dim 1 : vector<4x256xf32>, i32 -> vector<4x256xf32>
    %c3 = arith.constant 3 : index
    %c0_21 = arith.constant 0 : index
    %c0_22 = arith.constant 0 : index
    %34 = vector.load %arg2[%c3, %c0_21, %c0_22] : memref<9x1x256xf32, #tpu.memory_space<vmem>>, vector<1x1x256xf32>
    %35 = vector.shape_cast %34 : vector<1x1x256xf32> to vector<1x256xf32>
    %36 = vector.broadcast %35 : vector<1x256xf32> to vector<4x256xf32>
    %37 = arith.mulf %33, %36 : vector<4x256xf32>
    %c3_23 = arith.constant 3 : index
    %c0_24 = arith.constant 0 : index
    %c0_25 = arith.constant 0 : index
    %38 = vector.load %arg3[%c3_23, %c0_24, %c0_25] : memref<9x32x4xbf16, #tpu.memory_space<vmem>>, vector<1x32x4xbf16>
    %39 = vector.shape_cast %38 : vector<1x32x4xbf16> to vector<32x4xbf16>
    %40 = arith.truncf %37 : vector<4x256xf32> to vector<4x256xbf16>
    %cst_26 = arith.constant dense<0.000000e+00> : vector<32x256xf32>
    %41 = tpu.matmul %39, %40, %cst_26 {dimension_numbers = #tpu.dot_dimension_numbers<[1], [0], [0], [1], [0, 0, 1, 1], [], []>} : vector<32x4xbf16>, vector<4x256xbf16>, vector<32x256xf32> -> vector<32x256xf32>
    %42 = arith.addf %32, %41 : vector<32x256xf32>
    %c4 = arith.constant 4 : index
    %c0_27 = arith.constant 0 : index
    %c0_28 = arith.constant 0 : index
    %43 = vector.load %arg2[%c4, %c0_27, %c0_28] : memref<9x1x256xf32, #tpu.memory_space<vmem>>, vector<1x1x256xf32>
    %44 = vector.shape_cast %43 : vector<1x1x256xf32> to vector<1x256xf32>
    %45 = vector.broadcast %44 : vector<1x256xf32> to vector<4x256xf32>
    %46 = arith.mulf %1, %45 : vector<4x256xf32>
    %c4_29 = arith.constant 4 : index
    %c0_30 = arith.constant 0 : index
    %c0_31 = arith.constant 0 : index
    %47 = vector.load %arg3[%c4_29, %c0_30, %c0_31] : memref<9x32x4xbf16, #tpu.memory_space<vmem>>, vector<1x32x4xbf16>
    %48 = vector.shape_cast %47 : vector<1x32x4xbf16> to vector<32x4xbf16>
    %49 = arith.truncf %46 : vector<4x256xf32> to vector<4x256xbf16>
    %cst_32 = arith.constant dense<0.000000e+00> : vector<32x256xf32>
    %50 = tpu.matmul %48, %49, %cst_32 {dimension_numbers = #tpu.dot_dimension_numbers<[1], [0], [0], [1], [0, 0, 1, 1], [], []>} : vector<32x4xbf16>, vector<4x256xbf16>, vector<32x256xf32> -> vector<32x256xf32>
    %51 = arith.addf %42, %50 : vector<32x256xf32>
    %c255_i32 = arith.constant 255 : i32
    %52 = tpu.dynamic_rotate %1 by %c255_i32 dim 1 : vector<4x256xf32>, i32 -> vector<4x256xf32>
    %c5 = arith.constant 5 : index
    %c0_33 = arith.constant 0 : index
    %c0_34 = arith.constant 0 : index
    %53 = vector.load %arg2[%c5, %c0_33, %c0_34] : memref<9x1x256xf32, #tpu.memory_space<vmem>>, vector<1x1x256xf32>
    %54 = vector.shape_cast %53 : vector<1x1x256xf32> to vector<1x256xf32>
    %55 = vector.broadcast %54 : vector<1x256xf32> to vector<4x256xf32>
    %56 = arith.mulf %52, %55 : vector<4x256xf32>
    %c5_35 = arith.constant 5 : index
    %c0_36 = arith.constant 0 : index
    %c0_37 = arith.constant 0 : index
    %57 = vector.load %arg3[%c5_35, %c0_36, %c0_37] : memref<9x32x4xbf16, #tpu.memory_space<vmem>>, vector<1x32x4xbf16>
    %58 = vector.shape_cast %57 : vector<1x32x4xbf16> to vector<32x4xbf16>
    %59 = arith.truncf %56 : vector<4x256xf32> to vector<4x256xbf16>
    %cst_38 = arith.constant dense<0.000000e+00> : vector<32x256xf32>
    %60 = tpu.matmul %58, %59, %cst_38 {dimension_numbers = #tpu.dot_dimension_numbers<[1], [0], [0], [1], [0, 0, 1, 1], [], []>} : vector<32x4xbf16>, vector<4x256xbf16>, vector<32x256xf32> -> vector<32x256xf32>
    %61 = arith.addf %51, %60 : vector<32x256xf32>
    %c241_i32 = arith.constant 241 : i32
    %62 = tpu.dynamic_rotate %1 by %c241_i32 dim 1 : vector<4x256xf32>, i32 -> vector<4x256xf32>
    %c6 = arith.constant 6 : index
    %c0_39 = arith.constant 0 : index
    %c0_40 = arith.constant 0 : index
    %63 = vector.load %arg2[%c6, %c0_39, %c0_40] : memref<9x1x256xf32, #tpu.memory_space<vmem>>, vector<1x1x256xf32>
    %64 = vector.shape_cast %63 : vector<1x1x256xf32> to vector<1x256xf32>
    %65 = vector.broadcast %64 : vector<1x256xf32> to vector<4x256xf32>
    %66 = arith.mulf %62, %65 : vector<4x256xf32>
    %c6_41 = arith.constant 6 : index
    %c0_42 = arith.constant 0 : index
    %c0_43 = arith.constant 0 : index
    %67 = vector.load %arg3[%c6_41, %c0_42, %c0_43] : memref<9x32x4xbf16, #tpu.memory_space<vmem>>, vector<1x32x4xbf16>
    %68 = vector.shape_cast %67 : vector<1x32x4xbf16> to vector<32x4xbf16>
    %69 = arith.truncf %66 : vector<4x256xf32> to vector<4x256xbf16>
    %cst_44 = arith.constant dense<0.000000e+00> : vector<32x256xf32>
    %70 = tpu.matmul %68, %69, %cst_44 {dimension_numbers = #tpu.dot_dimension_numbers<[1], [0], [0], [1], [0, 0, 1, 1], [], []>} : vector<32x4xbf16>, vector<4x256xbf16>, vector<32x256xf32> -> vector<32x256xf32>
    %71 = arith.addf %61, %70 : vector<32x256xf32>
    %c240_i32 = arith.constant 240 : i32
    %72 = tpu.dynamic_rotate %1 by %c240_i32 dim 1 : vector<4x256xf32>, i32 -> vector<4x256xf32>
    %c7 = arith.constant 7 : index
    %c0_45 = arith.constant 0 : index
    %c0_46 = arith.constant 0 : index
    %73 = vector.load %arg2[%c7, %c0_45, %c0_46] : memref<9x1x256xf32, #tpu.memory_space<vmem>>, vector<1x1x256xf32>
    %74 = vector.shape_cast %73 : vector<1x1x256xf32> to vector<1x256xf32>
    %75 = vector.broadcast %74 : vector<1x256xf32> to vector<4x256xf32>
    %76 = arith.mulf %72, %75 : vector<4x256xf32>
    %c7_47 = arith.constant 7 : index
    %c0_48 = arith.constant 0 : index
    %c0_49 = arith.constant 0 : index
    %77 = vector.load %arg3[%c7_47, %c0_48, %c0_49] : memref<9x32x4xbf16, #tpu.memory_space<vmem>>, vector<1x32x4xbf16>
    %78 = vector.shape_cast %77 : vector<1x32x4xbf16> to vector<32x4xbf16>
    %79 = arith.truncf %76 : vector<4x256xf32> to vector<4x256xbf16>
    %cst_50 = arith.constant dense<0.000000e+00> : vector<32x256xf32>
    %80 = tpu.matmul %78, %79, %cst_50 {dimension_numbers = #tpu.dot_dimension_numbers<[1], [0], [0], [1], [0, 0, 1, 1], [], []>} : vector<32x4xbf16>, vector<4x256xbf16>, vector<32x256xf32> -> vector<32x256xf32>
    %81 = arith.addf %71, %80 : vector<32x256xf32>
    %c239_i32 = arith.constant 239 : i32
    %82 = tpu.dynamic_rotate %1 by %c239_i32 dim 1 : vector<4x256xf32>, i32 -> vector<4x256xf32>
    %c8 = arith.constant 8 : index
    %c0_51 = arith.constant 0 : index
    %c0_52 = arith.constant 0 : index
    %83 = vector.load %arg2[%c8, %c0_51, %c0_52] : memref<9x1x256xf32, #tpu.memory_space<vmem>>, vector<1x1x256xf32>
    %84 = vector.shape_cast %83 : vector<1x1x256xf32> to vector<1x256xf32>
    %85 = vector.broadcast %84 : vector<1x256xf32> to vector<4x256xf32>
    %86 = arith.mulf %82, %85 : vector<4x256xf32>
    %c8_53 = arith.constant 8 : index
    %c0_54 = arith.constant 0 : index
    %c0_55 = arith.constant 0 : index
    %87 = vector.load %arg3[%c8_53, %c0_54, %c0_55] : memref<9x32x4xbf16, #tpu.memory_space<vmem>>, vector<1x32x4xbf16>
    %88 = vector.shape_cast %87 : vector<1x32x4xbf16> to vector<32x4xbf16>
    %89 = arith.truncf %86 : vector<4x256xf32> to vector<4x256xbf16>
    %cst_56 = arith.constant dense<0.000000e+00> : vector<32x256xf32>
    %90 = tpu.matmul %88, %89, %cst_56 {dimension_numbers = #tpu.dot_dimension_numbers<[1], [0], [0], [1], [0, 0, 1, 1], [], []>} : vector<32x4xbf16>, vector<4x256xbf16>, vector<32x256xf32> -> vector<32x256xf32>
    %91 = arith.addf %81, %90 : vector<32x256xf32>
    %c0_57 = arith.constant 0 : index
    %c0_58 = arith.constant 0 : index
    %92 = vector.load %arg4[%c0_57, %c0_58] : memref<32x1xf32, #tpu.memory_space<vmem>>, vector<32x1xf32>
    %93 = vector.broadcast %92 : vector<32x1xf32> to vector<32x256xf32>
    %94 = arith.addf %91, %93 : vector<32x256xf32>
    %cst_59 = arith.constant 0.000000e+00 : f32
    %95 = vector.broadcast %cst_59 : f32 to vector<32x256xf32>
    %96 = arith.maximumf %94, %95 : vector<32x256xf32>
    %c0_60 = arith.constant 0 : index
    %c0_61 = arith.constant 0 : index
    %97 = vector.load %arg5[%c0_60, %c0_61] : memref<32x32xbf16, #tpu.memory_space<vmem>>, vector<32x32xbf16>
    %98 = arith.truncf %96 : vector<32x256xf32> to vector<32x256xbf16>
    %cst_62 = arith.constant dense<0.000000e+00> : vector<32x256xf32>
    %99 = tpu.matmul %97, %98, %cst_62 {dimension_numbers = #tpu.dot_dimension_numbers<[1], [0], [0], [1], [0, 0, 1, 1], [], []>} : vector<32x32xbf16>, vector<32x256xbf16>, vector<32x256xf32> -> vector<32x256xf32>
    %c0_63 = arith.constant 0 : index
    %c0_64 = arith.constant 0 : index
    %100 = vector.load %arg6[%c0_63, %c0_64] : memref<32x1xf32, #tpu.memory_space<vmem>>, vector<32x1xf32>
    %101 = vector.broadcast %100 : vector<32x1xf32> to vector<32x256xf32>
    %102 = arith.addf %99, %101 : vector<32x256xf32>
    %cst_65 = arith.constant 0.000000e+00 : f32
    %103 = vector.broadcast %cst_65 : f32 to vector<32x256xf32>
    %104 = arith.maximumf %102, %103 : vector<32x256xf32>
    %105 = arith.truncf %104 : vector<32x256xf32> to vector<32x256xbf16>
    %c0_66 = arith.constant 0 : index
    %c0_67 = arith.constant 0 : index
    %106 = vector.load %arg7[%c0_66, %c0_67] : memref<10x32xbf16, #tpu.memory_space<vmem>>, vector<10x32xbf16>
    %cst_68 = arith.constant dense<0.000000e+00> : vector<10x256xf32>
    %107 = tpu.matmul %106, %105, %cst_68 {dimension_numbers = #tpu.dot_dimension_numbers<[1], [0], [0], [1], [0, 0, 1, 1], [], []>} : vector<10x32xbf16>, vector<32x256xbf16>, vector<10x256xf32> -> vector<10x256xf32>
    %c0_69 = arith.constant 0 : index
    %c0_70 = arith.constant 0 : index
    %108 = vector.load %arg8[%c0_69, %c0_70] : memref<10x1xf32, #tpu.memory_space<vmem>>, vector<10x1xf32>
    %109 = vector.broadcast %108 : vector<10x1xf32> to vector<10x256xf32>
    %110 = arith.addf %107, %109 : vector<10x256xf32>
    %cst_71 = arith.constant dense<0xFF800000> : vector<256xf32>
    %111 = vector.multi_reduction <maximumf>, %110, %cst_71 [0] : vector<10x256xf32> to vector<256xf32>
    %112 = vector.shape_cast %111 : vector<256xf32> to vector<1x256xf32>
    %113 = vector.broadcast %112 : vector<1x256xf32> to vector<10x256xf32>
    %114 = arith.subf %110, %113 : vector<10x256xf32>
    %115 = math.exp %114 : vector<10x256xf32>
    %cst_72 = arith.constant dense<0.000000e+00> : vector<256xf32>
    %116 = vector.multi_reduction <add>, %115, %cst_72 [0] : vector<10x256xf32> to vector<256xf32>
    %117 = vector.shape_cast %116 : vector<256xf32> to vector<1x256xf32>
    %118 = math.log %117 : vector<1x256xf32>
    %119 = vector.broadcast %112 : vector<1x256xf32> to vector<10x256xf32>
    %120 = arith.subf %110, %119 : vector<10x256xf32>
    %121 = vector.broadcast %118 : vector<1x256xf32> to vector<10x256xf32>
    %122 = arith.subf %120, %121 : vector<10x256xf32>
    %123 = arith.truncf %122 : vector<10x256xf32> to vector<10x256xbf16>
    %c0_73 = arith.constant 0 : index
    %c0_74 = arith.constant 0 : index
    %c0_75 = arith.constant 0 : index
    %124 = vector.load %arg11[%c0_73, %c0_74, %c0_75] : memref<1x10x256xbf16, #tpu.memory_space<vmem>>, vector<1x10x256xbf16>
    %125 = vector.shape_cast %124 : vector<1x10x256xbf16> to vector<10x256xbf16>
    %126 = vector.shape_cast %123 : vector<10x256xbf16> to vector<1x10x256xbf16>
    tpu.vector_store %arg11[%c0_73, %c0_74, %c0_75], %126 {strides = array<i32>} : memref<1x10x256xbf16, #tpu.memory_space<vmem>>, vector<1x10x256xbf16>,
    %c0_76 = arith.constant 0 : index
    %c0_77 = arith.constant 0 : index
    %127 = vector.load %arg9[%c0_76, %c0_77] : memref<1x32xbf16, #tpu.memory_space<vmem>>, vector<1x32xbf16>
    %cst_78 = arith.constant dense<0.000000e+00> : vector<1x256xf32>
    %128 = tpu.matmul %127, %105, %cst_78 {dimension_numbers = #tpu.dot_dimension_numbers<[1], [0], [0], [1], [0, 0, 1, 1], [], []>} : vector<1x32xbf16>, vector<32x256xbf16>, vector<1x256xf32> -> vector<1x256xf32>
    %c0_79 = arith.constant 0 : index
    %c0_80 = arith.constant 0 : index
    %129 = vector.load %arg10[%c0_79, %c0_80] : memref<1x1xf32, #tpu.memory_space<vmem>>, vector<1x1xf32>
    %130 = vector.broadcast %129 : vector<1x1xf32> to vector<1x256xf32>
    %131 = arith.addf %128, %130 : vector<1x256xf32>
    %c16_i32_81 = arith.constant 16 : i32
    %132 = tpu.dynamic_rotate %131 by %c16_i32_81 dim 1 : vector<1x256xf32>, i32 -> vector<1x256xf32>
    %133 = arith.maximumf %131, %132 : vector<1x256xf32>
    %c32_i32 = arith.constant 32 : i32
    %134 = tpu.dynamic_rotate %133 by %c32_i32 dim 1 : vector<1x256xf32>, i32 -> vector<1x256xf32>
    %135 = arith.maximumf %133, %134 : vector<1x256xf32>
    %c64_i32 = arith.constant 64 : i32
    %136 = tpu.dynamic_rotate %135 by %c64_i32 dim 1 : vector<1x256xf32>, i32 -> vector<1x256xf32>
    %137 = arith.maximumf %135, %136 : vector<1x256xf32>
    %c128_i32 = arith.constant 128 : i32
    %138 = tpu.dynamic_rotate %137 by %c128_i32 dim 1 : vector<1x256xf32>, i32 -> vector<1x256xf32>
    %139 = arith.maximumf %137, %138 : vector<1x256xf32>
    %140 = arith.subf %131, %139 : vector<1x256xf32>
    %141 = math.exp %140 : vector<1x256xf32>
    %c16_i32_82 = arith.constant 16 : i32
    %142 = tpu.dynamic_rotate %141 by %c16_i32_82 dim 1 : vector<1x256xf32>, i32 -> vector<1x256xf32>
    %143 = arith.addf %141, %142 : vector<1x256xf32>
    %c32_i32_83 = arith.constant 32 : i32
    %144 = tpu.dynamic_rotate %143 by %c32_i32_83 dim 1 : vector<1x256xf32>, i32 -> vector<1x256xf32>
    %145 = arith.addf %143, %144 : vector<1x256xf32>
    %c64_i32_84 = arith.constant 64 : i32
    %146 = tpu.dynamic_rotate %145 by %c64_i32_84 dim 1 : vector<1x256xf32>, i32 -> vector<1x256xf32>
    %147 = arith.addf %145, %146 : vector<1x256xf32>
    %c128_i32_85 = arith.constant 128 : i32
    %148 = tpu.dynamic_rotate %147 by %c128_i32_85 dim 1 : vector<1x256xf32>, i32 -> vector<1x256xf32>
    %149 = arith.addf %147, %148 : vector<1x256xf32>
    %150 = arith.divf %141, %149 : vector<1x256xf32>
    %c0_86 = arith.constant 0 : index
    %c0_87 = arith.constant 0 : index
    %c0_88 = arith.constant 0 : index
    %151 = vector.load %arg12[%c0_86, %c0_87, %c0_88] : memref<1x1x256xf32, #tpu.memory_space<vmem>>, vector<1x1x256xf32>
    %152 = vector.shape_cast %151 : vector<1x1x256xf32> to vector<1x256xf32>
    %153 = vector.shape_cast %150 : vector<1x256xf32> to vector<1x1x256xf32>
    tpu.vector_store %arg12[%c0_86, %c0_87, %c0_88], %153 {strides = array<i32>} : memref<1x1x256xf32, #tpu.memory_space<vmem>>, vector<1x1x256xf32>,
    return
  }
  func.func @transform_0(%arg0: i32) -> (i32, i32, i32) {
    %c0_i32 = arith.constant 0 : i32
    %c0_i32_0 = arith.constant 0 : i32
    %c0_i32_1 = arith.constant 0 : i32
    return %arg0, %c0_i32, %c0_i32_0 : i32, i32, i32
  }
  func.func @transform_1(%arg0: i32) -> (i32, i32, i32) {
    %c0_i32 = arith.constant 0 : i32
    %c0_i32_0 = arith.constant 0 : i32
    %c0_i32_1 = arith.constant 0 : i32
    %c0_i32_2 = arith.constant 0 : i32
    return %c0_i32, %c0_i32_0, %c0_i32_1 : i32, i32, i32
  }
  func.func @transform_2(%arg0: i32) -> (i32, i32, i32) {
    %c0_i32 = arith.constant 0 : i32
    %c0_i32_0 = arith.constant 0 : i32
    %c0_i32_1 = arith.constant 0 : i32
    %c0_i32_2 = arith.constant 0 : i32
    return %c0_i32, %c0_i32_0, %c0_i32_1 : i32, i32, i32
  }
  func.func @transform_3(%arg0: i32) -> (i32, i32) {
    %c0_i32 = arith.constant 0 : i32
    %c0_i32_0 = arith.constant 0 : i32
    %c0_i32_1 = arith.constant 0 : i32
    return %c0_i32, %c0_i32_0 : i32, i32
  }
  func.func @transform_4(%arg0: i32) -> (i32, i32) {
    %c0_i32 = arith.constant 0 : i32
    %c0_i32_0 = arith.constant 0 : i32
    %c0_i32_1 = arith.constant 0 : i32
    return %c0_i32, %c0_i32_0 : i32, i32
  }
  func.func @transform_5(%arg0: i32) -> (i32, i32) {
    %c0_i32 = arith.constant 0 : i32
    %c0_i32_0 = arith.constant 0 : i32
    %c0_i32_1 = arith.constant 0 : i32
    return %c0_i32, %c0_i32_0 : i32, i32
  }
  func.func @transform_6(%arg0: i32) -> (i32, i32) {
    %c0_i32 = arith.constant 0 : i32
    %c0_i32_0 = arith.constant 0 : i32
    %c0_i32_1 = arith.constant 0 : i32
    return %c0_i32, %c0_i32_0 : i32, i32
  }
  func.func @transform_7(%arg0: i32) -> (i32, i32) {
    %c0_i32 = arith.constant 0 : i32
    %c0_i32_0 = arith.constant 0 : i32
    %c0_i32_1 = arith.constant 0 : i32
    return %c0_i32, %c0_i32_0 : i32, i32
  }
  func.func @transform_8(%arg0: i32) -> (i32, i32) {
    %c0_i32 = arith.constant 0 : i32
    %c0_i32_0 = arith.constant 0 : i32
    %c0_i32_1 = arith.constant 0 : i32
    return %c0_i32, %c0_i32_0 : i32, i32
  }
  func.func @transform_9(%arg0: i32) -> (i32, i32) {
    %c0_i32 = arith.constant 0 : i32
    %c0_i32_0 = arith.constant 0 : i32
    %c0_i32_1 = arith.constant 0 : i32
    return %c0_i32, %c0_i32_0 : i32, i32
  }
  func.func @transform_10(%arg0: i32) -> (i32, i32, i32) {
    %c0_i32 = arith.constant 0 : i32
    %c0_i32_0 = arith.constant 0 : i32
    %c0_i32_1 = arith.constant 0 : i32
    return %arg0, %c0_i32, %c0_i32_0 : i32, i32, i32
  }
  func.func @transform_11(%arg0: i32) -> (i32, i32, i32) {
    %c0_i32 = arith.constant 0 : i32
    %c0_i32_0 = arith.constant 0 : i32
    %c0_i32_1 = arith.constant 0 : i32
    return %arg0, %c0_i32, %c0_i32_0 : i32, i32, i32
  }
}

</mosaic_0001>

<llo_original>
// kernel: ctc2d_forward_test.1
$region0: #{ctc2d_forward_test.1}
  #allocation0 [shape = 'u32[]', space=smem, size = 0x4, offset = 0x4, fixed_abs, tag = 'smem constant byte address 0x4 - core index']
  #allocation1 [shape = 'u32[144,128]{1,0:T(1,128)}', space=vmem, size = 0x12000, scoped, tag = 'internal scratch']
  #allocation2 [shape = 'f32[1,1]{1,0:T(1,128)S(1)}', space=vmem, size = 0x200, scoped, tag = 'scoped memory for ctc2d_forward_test.1']
  %s0 = inlined_call_operand.vmem [shape: f32[2,4,256], index: 0, kind: input, shape index: {}]
  %s1 = inlined_call_operand.vmem [shape: f32[9,1,256], index: 1, kind: input, shape index: {}]
  %s2 = inlined_call_operand.vmem [shape: bf16[9,32,4], index: 2, kind: input, shape index: {}]
  %s3 = inlined_call_operand.vmem [shape: f32[32,1], index: 3, kind: input, shape index: {}]
  %s4 = inlined_call_operand.vmem [shape: bf16[32,32], index: 4, kind: input, shape index: {}]
  %s5 = inlined_call_operand.vmem [shape: f32[32,1], index: 5, kind: input, shape index: {}]
  %s6 = inlined_call_operand.vmem [shape: bf16[10,32], index: 6, kind: input, shape index: {}]
  %s7 = inlined_call_operand.vmem [shape: f32[10,1], index: 7, kind: input, shape index: {}]
  %s8 = inlined_call_operand.vmem [shape: bf16[1,32], index: 8, kind: input, shape index: {}]
  %s9 = inlined_call_operand.<no memory space> [shape: f32[1,1], index: 9, kind: input, shape index: {}]
  %s10 = inlined_call_operand.vmem [shape: bf16[2,10,256], index: 10, kind: output, shape index: {0}]
  %s11 = inlined_call_operand.vmem [shape: f32[2,1,256], index: 11, kind: output, shape index: {1}]
  %12 = xla_tuple %s10, %s11
  %s13 = sld [smem:[#allocation0]]
  $region81: #{ctc2d_forward_test.1} parent=0
    _
  %s15 = ssub.s32 1, %s13
  %s16 = scalar_select 0, %s15, %s13
  %v17 = vstv %s9
  %18 = vst [vmem:[#allocation2] sm:$0x1] %v17
  loop: start=0, step=1, limit=4
  $region2: #{ctc2d_forward_test.1} parent=0 // loop_pre_header
    _
  $region3: #{ctc2d_forward_test.1} parent=0 // loop_header
    %s20 = sphi 0, %s24
    %p21 = scmp.ge.s32.totalorder %s20, 4
    %s30 = sphi 0, %s32
    %s33 = sphi 0, %s30
    %s34 = sphi 0, %s33
    %s50 = sphi 0, %s34
    %s54 = sphi 0, %s54
    %s56 = sphi 0, %s54
    %s57 = sphi 0, %s56
    %s71 = sphi 0, %s57
    %s75 = sphi 0, %s75
    %s77 = sphi 0, %s75
    %s78 = sphi 0, %s77
    %s92 = sphi 0, %s78
    %s96 = sphi 0, %s96
    %s98 = sphi 0, %s96
    %s99 = sphi 0, %s98
    %s113 = sphi 0, %s99
    %s117 = sphi 0, %s117
    %s119 = sphi 0, %s117
    %s120 = sphi 0, %s119
    %s134 = sphi 0, %s120
    %s138 = sphi 0, %s138
    %s140 = sphi 0, %s138
    %s141 = sphi 0, %s140
    %s155 = sphi 0, %s141
    %s159 = sphi 0, %s159
    %s161 = sphi 0, %s159
    %s162 = sphi 0, %s161
    %s176 = sphi 0, %s162
    %s180 = sphi 0, %s180
    %s182 = sphi 0, %s180
    %s183 = sphi 0, %s182
    %s197 = sphi 0, %s183
    %s201 = sphi 0, %s201
    %s203 = sphi 0, %s201
    %s204 = sphi 0, %s203
    %s218 = sphi 0, %s204
    %s222 = sphi 0, %s222
    %s224 = sphi 0, %s222
    %s225 = sphi 0, %s224
    %s239 = sphi 0, %s225
    %s245 = sphi 0, %s247
    %s248 = sphi 0, %s245
    %s249 = sphi 0, %s248
    %s265 = sphi 0, %s249
    %s271 = sphi 0, %s273
    %s274 = sphi 0, %s271
    %s275 = sphi 0, %s274
    %s291 = sphi 0, %s275
  $region4: #{ctc2d_forward_test.1} parent=0 // loop_header_branch
    %23 = sbr.rel (%p21) target = $region8
  $region5: #{ctc2d_forward_test.1} parent=0 // loop_body
    %s25 = ssub.s32 %s20, 1
    %s26 = ssub.s32 %s20, 2
    %s27 = sadd.s32 %s20, 1
    %s28 = ssub.s32 %s20, %s27
    %p29 = scmp.eq.s32.totalorder %s28, 0
    %s31 = sadd.s32 %s30, 1
    %s32 = scalar_select %p29, %s30, %s31
    %p35 = pneg %p29
    %p36 = scmp.eq.s32.totalorder %s20, 1
    %p37 = por %p35, %p36
    %p38 = scmp.ne.s32.totalorder %s30, %s33
    %p39 = scmp.eq.s32.totalorder %s20, 0
    %p40 = por %p38, %p39
    %p41 = scmp.ne.s32.totalorder %s30, %s33
    %p42 = scmp.eq.s32.totalorder %s25, 1
    %p43 = por %p41, %p42
    %p44 = scmp.ne.s32.totalorder %s33, %s34
    %p45 = scmp.eq.s32.totalorder %s25, 0
    %p46 = por %p44, %p45
    %p47 = scmp.ne.s32.totalorder %s33, %s34
    %p48 = scmp.eq.s32.totalorder %s26, 1
    %p49 = por %p47, %p48
    %p51 = scmp.ne.s32.totalorder %s34, %s50
    %p52 = scmp.eq.s32.totalorder %s26, 0
    %p53 = por %p51, %p52
    %s55 = sadd.s32 %s54, 1
    %p58 = scmp.eq.s32.totalorder %s20, 1
    %p59 = scmp.ne.s32.totalorder %s54, %s56
    %p60 = scmp.eq.s32.totalorder %s20, 0
    %p61 = por %p59, %p60
    %p62 = scmp.ne.s32.totalorder %s54, %s56
    %p63 = scmp.eq.s32.totalorder %s25, 1
    %p64 = por %p62, %p63
    %p65 = scmp.ne.s32.totalorder %s56, %s57
    %p66 = scmp.eq.s32.totalorder %s25, 0
    %p67 = por %p65, %p66
    %p68 = scmp.ne.s32.totalorder %s56, %s57
    %p69 = scmp.eq.s32.totalorder %s26, 1
    %p70 = por %p68, %p69
    %p72 = scmp.ne.s32.totalorder %s57, %s71
    %p73 = scmp.eq.s32.totalorder %s26, 0
    %p74 = por %p72, %p73
    %s76 = sadd.s32 %s75, 1
    %p79 = scmp.eq.s32.totalorder %s20, 1
    %p80 = scmp.ne.s32.totalorder %s75, %s77
    %p81 = scmp.eq.s32.totalorder %s20, 0
    %p82 = por %p80, %p81
    %p83 = scmp.ne.s32.totalorder %s75, %s77
    %p84 = scmp.eq.s32.totalorder %s25, 1
    %p85 = por %p83, %p84
    %p86 = scmp.ne.s32.totalorder %s77, %s78
    %p87 = scmp.eq.s32.totalorder %s25, 0
    %p88 = por %p86, %p87
    %p89 = scmp.ne.s32.totalorder %s77, %s78
    %p90 = scmp.eq.s32.totalorder %s26, 1
    %p91 = por %p89, %p90
    %p93 = scmp.ne.s32.totalorder %s78, %s92
    %p94 = scmp.eq.s32.totalorder %s26, 0
    %p95 = por %p93, %p94
    %s97 = sadd.s32 %s96, 1
    %p100 = scmp.eq.s32.totalorder %s20, 1
    %p101 = scmp.ne.s32.totalorder %s96, %s98
    %p102 = scmp.eq.s32.totalorder %s20, 0
    %p103 = por %p101, %p102
    %p104 = scmp.ne.s32.totalorder %s96, %s98
    %p105 = scmp.eq.s32.totalorder %s25, 1
    %p106 = por %p104, %p105
    %p107 = scmp.ne.s32.totalorder %s98, %s99
    %p108 = scmp.eq.s32.totalorder %s25, 0
    %p109 = por %p107, %p108
    %p110 = scmp.ne.s32.totalorder %s98, %s99
    %p111 = scmp.eq.s32.totalorder %s26, 1
    %p112 = por %p110, %p111
    %p114 = scmp.ne.s32.totalorder %s99, %s113
    %p115 = scmp.eq.s32.totalorder %s26, 0
    %p116 = por %p114, %p115
    %s118 = sadd.s32 %s117, 1
    %p121 = scmp.eq.s32.totalorder %s20, 1
    %p122 = scmp.ne.s32.totalorder %s117, %s119
    %p123 = scmp.eq.s32.totalorder %s20, 0
    %p124 = por %p122, %p123
    %p125 = scmp.ne.s32.totalorder %s117, %s119
    %p126 = scmp.eq.s32.totalorder %s25, 1
    %p127 = por %p125, %p126
    %p128 = scmp.ne.s32.totalorder %s119, %s120
    %p129 = scmp.eq.s32.totalorder %s25, 0
    %p130 = por %p128, %p129
    %p131 = scmp.ne.s32.totalorder %s119, %s120
    %p132 = scmp.eq.s32.totalorder %s26, 1
    %p133 = por %p131, %p132
    %p135 = scmp.ne.s32.totalorder %s120, %s134
    %p136 = scmp.eq.s32.totalorder %s26, 0
    %p137 = por %p135, %p136
    %s139 = sadd.s32 %s138, 1
    %p142 = scmp.eq.s32.totalorder %s20, 1
    %p143 = scmp.ne.s32.totalorder %s138, %s140
    %p144 = scmp.eq.s32.totalorder %s20, 0
    %p145 = por %p143, %p144
    %p146 = scmp.ne.s32.totalorder %s138, %s140
    %p147 = scmp.eq.s32.totalorder %s25, 1
    %p148 = por %p146, %p147
    %p149 = scmp.ne.s32.totalorder %s140, %s141
    %p150 = scmp.eq.s32.totalorder %s25, 0
    %p151 = por %p149, %p150
    %p152 = scmp.ne.s32.totalorder %s140, %s141
    %p153 = scmp.eq.s32.totalorder %s26, 1
    %p154 = por %p152, %p153
    %p156 = scmp.ne.s32.totalorder %s141, %s155
    %p157 = scmp.eq.s32.totalorder %s26, 0
    %p158 = por %p156, %p157
    %s160 = sadd.s32 %s159, 1
    %p163 = scmp.eq.s32.totalorder %s20, 1
    %p164 = scmp.ne.s32.totalorder %s159, %s161
    %p165 = scmp.eq.s32.totalorder %s20, 0
    %p166 = por %p164, %p165
    %p167 = scmp.ne.s32.totalorder %s159, %s161
    %p168 = scmp.eq.s32.totalorder %s25, 1
    %p169 = por %p167, %p168
    %p170 = scmp.ne.s32.totalorder %s161, %s162
    %p171 = scmp.eq.s32.totalorder %s25, 0
    %p172 = por %p170, %p171
    %p173 = scmp.ne.s32.totalorder %s161, %s162
    %p174 = scmp.eq.s32.totalorder %s26, 1
    %p175 = por %p173, %p174
    %p177 = scmp.ne.s32.totalorder %s162, %s176
    %p178 = scmp.eq.s32.totalorder %s26, 0
    %p179 = por %p177, %p178
    %s181 = sadd.s32 %s180, 1
    %p184 = scmp.eq.s32.totalorder %s20, 1
    %p185 = scmp.ne.s32.totalorder %s180, %s182
    %p186 = scmp.eq.s32.totalorder %s20, 0
    %p187 = por %p185, %p186
    %p188 = scmp.ne.s32.totalorder %s180, %s182
    %p189 = scmp.eq.s32.totalorder %s25, 1
    %p190 = por %p188, %p189
    %p191 = scmp.ne.s32.totalorder %s182, %s183
    %p192 = scmp.eq.s32.totalorder %s25, 0
    %p193 = por %p191, %p192
    %p194 = scmp.ne.s32.totalorder %s182, %s183
    %p195 = scmp.eq.s32.totalorder %s26, 1
    %p196 = por %p194, %p195
    %p198 = scmp.ne.s32.totalorder %s183, %s197
    %p199 = scmp.eq.s32.totalorder %s26, 0
    %p200 = por %p198, %p199
    %s202 = sadd.s32 %s201, 1
    %p205 = scmp.eq.s32.totalorder %s20, 1
    %p206 = scmp.ne.s32.totalorder %s201, %s203
    %p207 = scmp.eq.s32.totalorder %s20, 0
    %p208 = por %p206, %p207
    %p209 = scmp.ne.s32.totalorder %s201, %s203
    %p210 = scmp.eq.s32.totalorder %s25, 1
    %p211 = por %p209, %p210
    %p212 = scmp.ne.s32.totalorder %s203, %s204
    %p213 = scmp.eq.s32.totalorder %s25, 0
    %p214 = por %p212, %p213
    %p215 = scmp.ne.s32.totalorder %s203, %s204
    %p216 = scmp.eq.s32.totalorder %s26, 1
    %p217 = por %p215, %p216
    %p219 = scmp.ne.s32.totalorder %s204, %s218
    %p220 = scmp.eq.s32.totalorder %s26, 0
    %p221 = por %p219, %p220
    %s223 = sadd.s32 %s222, 1
    %p226 = scmp.eq.s32.totalorder %s20, 1
    %p227 = scmp.ne.s32.totalorder %s222, %s224
    %p228 = scmp.eq.s32.totalorder %s20, 0
    %p229 = por %p227, %p228
    %p230 = scmp.ne.s32.totalorder %s222, %s224
    %p231 = scmp.eq.s32.totalorder %s25, 1
    %p232 = por %p230, %p231
    %p233 = scmp.ne.s32.totalorder %s224, %s225
    %p234 = scmp.eq.s32.totalorder %s25, 0
    %p235 = por %p233, %p234
    %p236 = scmp.ne.s32.totalorder %s224, %s225
    %p237 = scmp.eq.s32.totalorder %s26, 1
    %p238 = por %p236, %p237
    %p240 = scmp.ne.s32.totalorder %s225, %s239
    %p241 = scmp.eq.s32.totalorder %s26, 0
    %p242 = por %p240, %p241
    %s243 = ssub.s32 %s20, %s27
    %p244 = scmp.eq.s32.totalorder %s243, 0
    %s246 = sadd.s32 %s245, 1
    %s247 = scalar_select %p244, %s245, %s246
    %p250 = pneg %p244
    %p251 = scmp.eq.s32.totalorder %s20, 1
    %p252 = por %p250, %p251
    %p253 = scmp.ne.s32.totalorder %s245, %s248
    %p254 = scmp.eq.s32.totalorder %s20, 0
    %p255 = por %p253, %p254
    %p256 = scmp.ne.s32.totalorder %s245, %s248
    %p257 = scmp.eq.s32.totalorder %s25, 1
    %p258 = por %p256, %p257
    %p259 = scmp.ne.s32.totalorder %s248, %s249
    %p260 = scmp.eq.s32.totalorder %s25, 0
    %p261 = por %p259, %p260
    %p262 = scmp.ne.s32.totalorder %s248, %s249
    %p263 = scmp.eq.s32.totalorder %s26, 1
    %p264 = por %p262, %p263
    %p266 = scmp.ne.s32.totalorder %s249, %s265
    %p267 = scmp.eq.s32.totalorder %s26, 0
    %p268 = por %p266, %p267
    %s269 = ssub.s32 %s20, %s27
    %p270 = scmp.eq.s32.totalorder %s269, 0
    %s272 = sadd.s32 %s271, 1
    %s273 = scalar_select %p270, %s271, %s272
    %p276 = pneg %p270
    %p277 = scmp.eq.s32.totalorder %s20, 1
    %p278 = por %p276, %p277
    %p279 = scmp.ne.s32.totalorder %s271, %s274
    %p280 = scmp.eq.s32.totalorder %s20, 0
    %p281 = por %p279, %p280
    %p282 = scmp.ne.s32.totalorder %s271, %s274
    %p283 = scmp.eq.s32.totalorder %s25, 1
    %p284 = por %p282, %p283
    %p285 = scmp.ne.s32.totalorder %s274, %s275
    %p286 = scmp.eq.s32.totalorder %s25, 0
    %p287 = por %p285, %p286
    %p288 = scmp.ne.s32.totalorder %s274, %s275
    %p289 = scmp.eq.s32.totalorder %s26, 1
    %p290 = por %p288, %p289
    %p292 = scmp.ne.s32.totalorder %s275, %s291
    %p293 = scmp.eq.s32.totalorder %s26, 0
    %p294 = por %p292, %p293
    %p295 = scmp.le.s32.totalorder 1, %s20
    %p296 = scmp.lt.s32.totalorder %s20, 3
    %p297 = pnand %p295, %p296
    %p298 = pneg %p297
    // Predicated region
    $region9: #{ctc2d_forward_test.1} parent=5 // pred_check
      _
    $region10: #{ctc2d_forward_test.1} parent=5 // pred_check_branch
      %300 = sbr.rel (%p297) target = $region12
    $region11: #{ctc2d_forward_test.1} parent=5 // pred_region
      %s301 = ssub.s32 %s20, 1
      // Predicated region
      $region13: #{ctc2d_forward_test.1} parent=11 // pred_check
        %p302 = pneg %p67
      $region14: #{ctc2d_forward_test.1} parent=11 // pred_check_branch
        %304 = sbr.rel (%p302) target = $region16
      $region15: #{ctc2d_forward_test.1} parent=11 // pred_region
        _
      $region16: #{ctc2d_forward_test.1} parent=11 // pred_fallthru
        _
      // Predicated region
      $region17: #{ctc2d_forward_test.1} parent=11 // pred_check
        %p305 = pneg %p88
      $region18: #{ctc2d_forward_test.1} parent=11 // pred_check_branch
        %307 = sbr.rel (%p305) target = $region20
      $region19: #{ctc2d_forward_test.1} parent=11 // pred_region
        _
      $region20: #{ctc2d_forward_test.1} parent=11 // pred_fallthru
        _
      // Predicated region
      $region21: #{ctc2d_forward_test.1} parent=11 // pred_check
        %p308 = pneg %p109
      $region22: #{ctc2d_forward_test.1} parent=11 // pred_check_branch
        %310 = sbr.rel (%p308) target = $region24
      $region23: #{ctc2d_forward_test.1} parent=11 // pred_region
        _
      $region24: #{ctc2d_forward_test.1} parent=11 // pred_fallthru
        _
      // Predicated region
      $region25: #{ctc2d_forward_test.1} parent=11 // pred_check
        %p311 = pneg %p130
      $region26: #{ctc2d_forward_test.1} parent=11 // pred_check_branch
        %313 = sbr.rel (%p311) target = $region28
      $region27: #{ctc2d_forward_test.1} parent=11 // pred_region
        _
      $region28: #{ctc2d_forward_test.1} parent=11 // pred_fallthru
        _
      // Predicated region
      $region29: #{ctc2d_forward_test.1} parent=11 // pred_check
        %p314 = pneg %p151
      $region30: #{ctc2d_forward_test.1} parent=11 // pred_check_branch
        %316 = sbr.rel (%p314) target = $region32
      $region31: #{ctc2d_forward_test.1} parent=11 // pred_region
        _
      $region32: #{ctc2d_forward_test.1} parent=11 // pred_fallthru
        _
      // Predicated region
      $region33: #{ctc2d_forward_test.1} parent=11 // pred_check
        %p317 = pneg %p172
      $region34: #{ctc2d_forward_test.1} parent=11 // pred_check_branch
        %319 = sbr.rel (%p317) target = $region36
      $region35: #{ctc2d_forward_test.1} parent=11 // pred_region
        _
      $region36: #{ctc2d_forward_test.1} parent=11 // pred_fallthru
        _
      // Predicated region
      $region37: #{ctc2d_forward_test.1} parent=11 // pred_check
        %p320 = pneg %p193
      $region38: #{ctc2d_forward_test.1} parent=11 // pred_check_branch
        %322 = sbr.rel (%p320) target = $region40
      $region39: #{ctc2d_forward_test.1} parent=11 // pred_region
        _
      $region40: #{ctc2d_forward_test.1} parent=11 // pred_fallthru
        _
      // Predicated region
      $region41: #{ctc2d_forward_test.1} parent=11 // pred_check
        %p323 = pneg %p214
      $region42: #{ctc2d_forward_test.1} parent=11 // pred_check_branch
        %325 = sbr.rel (%p323) target = $region44
      $region43: #{ctc2d_forward_test.1} parent=11 // pred_region
        _
      $region44: #{ctc2d_forward_test.1} parent=11 // pred_fallthru
        _
      // Predicated region
      $region45: #{ctc2d_forward_test.1} parent=11 // pred_check
        %p326 = pneg %p235
      $region46: #{ctc2d_forward_test.1} parent=11 // pred_check_branch
        %328 = sbr.rel (%p326) target = $region48
      $region47: #{ctc2d_forward_test.1} parent=11 // pred_region
        _
      $region48: #{ctc2d_forward_test.1} parent=11 // pred_fallthru
        _
    $region12: #{ctc2d_forward_test.1} parent=5 // pred_fallthru
      _
    %p329 = scmp.lt.s32.totalorder %s20, 2
    // Predicated region
    $region49: #{ctc2d_forward_test.1} parent=5 // pred_check
      %p330 = pneg %p329
    $region50: #{ctc2d_forward_test.1} parent=5 // pred_check_branch
      %332 = sbr.rel (%p330) target = $region52
    $region51: #{ctc2d_forward_test.1} parent=5 // pred_region
      // Predicated region
      $region53: #{ctc2d_forward_test.1} parent=51 // pred_check
        %p333 = pneg %p40
      $region54: #{ctc2d_forward_test.1} parent=51 // pred_check_branch
        %335 = sbr.rel (%p333) target = $region56
      $region55: #{ctc2d_forward_test.1} parent=51 // pred_region
        %p336 = scmp.lt.s32.totalorder %s20, 1
        %s337 = scalar_select %p336, %s20, 1
        %s338 = smul.addr %s337, 2
        %s339 = smul.addr %s338, 4
        %s340 = scalar_lea.vmem %s0, %s339
      $region56: #{ctc2d_forward_test.1} parent=51 // pred_fallthru
        _
    $region52: #{ctc2d_forward_test.1} parent=5 // pred_fallthru
      _
    %p341 = scmp.le.s32.totalorder 1, %s20
    %p342 = scmp.lt.s32.totalorder %s20, 3
    %p343 = pnand %p341, %p342
    %p344 = pneg %p343
    // Predicated region
    $region57: #{ctc2d_forward_test.1} parent=5 // pred_check
      _
    $region58: #{ctc2d_forward_test.1} parent=5 // pred_check_branch
      %346 = sbr.rel (%p343) target = $region60
    $region59: #{ctc2d_forward_test.1} parent=5 // pred_region
      %s347 = ssub.s32 %s20, 1
      %p348 = scmp.lt.s32.totalorder %s25, 1
      %s349 = scalar_select %p348, %s25, 1
      %s350 = smul.addr %s349, 2
      %s351 = smul.addr %s350, 4
      %s352 = scalar_lea.vmem %s0, %s351
      %p353 = pneg %p46
      %p354 = pneg %p43
      %p355 = pneg %p67
      %p356 = pneg %p64
      %p357 = pneg %p88
      %p358 = pneg %p85
      %p359 = pneg %p109
      %p360 = pneg %p106
      %p361 = pneg %p130
      %p362 = pneg %p127
      %p363 = pneg %p151
      %p364 = pneg %p148
      %p365 = pneg %p172
      %p366 = pneg %p169
      %p367 = pneg %p193
      %p368 = pneg %p190
      %p369 = pneg %p214
      %p370 = pneg %p211
      %p371 = pneg %p235
      %p372 = pneg %p232
      %p373 = pneg %p261
      %p374 = pneg %p258
      %p375 = scmp.lt.s32.totalorder %s25, 1
      %s376 = scalar_select %p375, %s25, 1
      %s377 = smul.addr %s376, 4
      %s378 = smul.addr %s377, 4
      %s379 = scalar_lea.vmem %s10, %s378
      %p380 = pneg %p287
      %p381 = pneg %p284
      %p382 = scmp.lt.s32.totalorder %s25, 1
      %s383 = scalar_select %p382, %s25, 1
      %s384 = smul.addr %s383, 2
      %s385 = scalar_lea.vmem %s11, %s384
      %p386 = scmp.lt.s32.totalorder %s25, 1
      %s387 = scalar_select %p386, %s25, 1
      %s388 = smul.addr %s387, 2
      %s389 = smul.addr %s388, 4
      %s390 = scalar_lea.vmem %s0, %s389
      %p391 = scmp.lt.s32.totalorder %s25, 1
      %s392 = scalar_select %p391, %s25, 1
      %s393 = smul.addr %s392, 4
      %s394 = smul.addr %s393, 4
      %s395 = scalar_lea.vmem %s10, %s394
      %p396 = scmp.lt.s32.totalorder %s25, 1
      %s397 = scalar_select %p396, %s25, 1
      %s398 = smul.addr %s397, 2
      %s399 = scalar_lea.vmem %s11, %s398
      %v401 = vld [vmem:[%s390] sm:$0xff]
      %v403 = vcombine.high %v401, %v401
      %405 = vrot.lane.b32.xlu0 %v401, 17
      %v406 = vpop.permute.xlu0 %405
      %407 = vrot.lane.b32.xlu0 %v403, 17
      %v408 = vpop.permute.xlu0 %407
      %v409 = vlaneseq
      %v410 = vand.u32 %v409, 127
      %vm411 = vcmp.lt.s32.totalorder %v410, 17
      %v412 = vsel %vm411, %v406, %v408
      %v413 = vsel %vm411, %v408, %v406
      %v414 = vld [vmem:[%s1] sm:$0x3]
      %v416 = vlaneseq
      %v417 = vshrl.u32 %v416, 7
      %v418 = vsub.s32 0, %v417
      %v419 = vrot.slane %v414, %v418
      %v420 = vlaneseq
      %v421 = vshrl.u32 %v420, 7
      %v422 = vsub.s32 1, %v421
      %v423 = vrot.slane %v414, %v422
      %v426 = vmul.f32 %v413, %v419
      %v427 = vmul.f32 %v412, %v423
      %v428 = vld [vmem:[%s2] sm:$0xf]
      %v429 = vld [vmem:[%s2 + $0x4] sm:$0xf]
      %v430 = vld [vmem:[%s2 + $0x8] sm:$0xf]
      %v431 = vld [vmem:[%s2 + $0xc] sm:$0xf]
      %v432 = vpack.c.bf16 %v426, %v426
      %v433 = vpack.c.bf16 %v427, %v427
      %434 = vrot.lane.b32.xlu0 %v401, 16
      %v435 = vpop.permute.xlu0 %434
      %436 = vrot.lane.b32.xlu0 %v403, 16
      %v437 = vpop.permute.xlu0 %436
      %vm438 = vcmp.lt.s32.totalorder %v410, 16
      %v439 = vsel %vm438, %v435, %v437
      %v440 = vsel %vm438, %v437, %v435
      %s441 = scalar_lea.vmem %s1, 2
      %v442 = vld [vmem:[%s441] sm:$0x3]
      %v444 = vlaneseq
      %v445 = vshrl.u32 %v444, 7
      %v446 = vsub.s32 0, %v445
      %v447 = vrot.slane %v442, %v446
      %v448 = vlaneseq
      %v449 = vshrl.u32 %v448, 7
      %v450 = vsub.s32 1, %v449
      %v451 = vrot.slane %v442, %v450
      %v454 = vmul.f32 %v440, %v447
      %v455 = vmul.f32 %v439, %v451
      %s456 = scalar_lea.vmem %s2, 16
      %v457 = vld [vmem:[%s456] sm:$0xf]
      %v458 = vld [vmem:[%s456 + $0x4] sm:$0xf]
      %v459 = vld [vmem:[%s456 + $0x8] sm:$0xf]
      %v460 = vld [vmem:[%s456 + $0xc] sm:$0xf]
      %v461 = vpack.c.bf16 %v454, %v454
      %v462 = vpack.c.bf16 %v455, %v455
      %v467 = vunpack.c.l.b16 %v457
      %v468 = vunpack.c.l.b16 %v458
      %v469 = vunpack.c.l.b16 %v459
      %v470 = vunpack.c.l.b16 %v460
      %v471 = vpack.c.b16 %v468, %v467
      %v472 = vpack.c.b16 %v470, %v469
      %vm473 = vcmask 31744
      %v475 = vsel %vm473, %v471, 0
      %v478 = vsel %vm473, %v472, 0
      %vm480 = vcmask 1041408
      %v482 = vsel %vm480, %v461, 0
      %v485 = vsel %vm480, %v462, 0
      %487 = vmatprep.subr.bf16.mxu0 %v485
      %488 = vmatpush1.bf16.msra.mxu0 %v482
      %489 = vmatprep.subr.bf16.mxu0 0
      %490 = vmatpush1.bf16.msra.mxu0 0
      %491 = vmatprep.subr.bf16.mxu0 0
      %492 = vmatpush1.bf16.msra.mxu0 0
      %493 = vmatprep.subr.bf16.mxu0 0
      %494 = vmatpush1.bf16.msra.mxu0 0
      %495 = vmatprep.subr.bf16.mxu0 0
      %496 = vmatpush1.bf16.msra.mxu0 0
      %497 = vmatprep.subr.bf16.mxu0 0
      %498 = vmatpush1.bf16.msra.mxu0 0
      %499 = vmatprep.subr.bf16.mxu0 0
      %500 = vmatpush1.bf16.msra.mxu0 0
      %501 = vmatprep.subr.bf16.mxu0 0
      %502 = vmatpush1.bf16.msra.mxu0 0
      %503 = vmatprep.subr.bf16.mxu0 0
      %504 = vmatpush1.bf16.msra.mxu0 0
      %505 = vmatprep.subr.bf16.mxu0 0
      %506 = vmatpush1.bf16.msra.mxu0 0
      %507 = vmatprep.subr.bf16.mxu0 0
      %508 = vmatpush1.bf16.msra.mxu0 0
      %509 = vmatprep.subr.bf16.mxu0 0
      %510 = vmatpush1.bf16.msra.mxu0 0
      %511 = vmatprep.subr.bf16.mxu0 0
      %512 = vmatpush1.bf16.msra.mxu0 0
      %513 = vmatprep.subr.bf16.mxu0 0
      %514 = vmatpush1.bf16.msra.mxu0 0
      %515 = vmatprep.subr.bf16.mxu0 0
      %516 = vmatpush1.bf16.msra.mxu0 0
      %517 = vmatprep.subr.bf16.mxu0 0
      %518 = vmatpush1.bf16.msra.mxu0 0
      %519 = vmatprep.mubr.bf16.mxu0 0
      %520 = vmatmul.mubr.bf16.gmra.mrb[0].mxu0 %v475
      %v521 = vpop.f32.mrb[0].mxu0
      %v522 = vadd.f32 0.0, %v521
      %v523 = vpop.f32.mrb[0].mxu0
      %v524 = vadd.f32 0.0, %v523
      %v525 = vpop.f32.mrb[0].mxu0
      %v526 = vadd.f32 0.0, %v525
      %v527 = vpop.f32.mrb[0].mxu0
      %v528 = vadd.f32 0.0, %v527
      %529 = vmatprep.mubr.bf16.mxu0 0
      %530 = vmatmul.mubr.bf16.gmra.mrb[0].mxu0 %v478
      %v531 = vpop.f32.mrb[0].mxu0
      %v532 = vadd.f32 0.0, %v531
      %v533 = vpop.f32.mrb[0].mxu0
      %v534 = vadd.f32 0.0, %v533
      %v535 = vpop.f32.mrb[0].mxu0
      %v536 = vadd.f32 0.0, %v535
      %v537 = vpop.f32.mrb[0].mxu0
      %v538 = vadd.f32 0.0, %v537
      %539 = vdwg.mxu0
      %v544 = vunpack.c.l.b16 %v428
      %v545 = vunpack.c.l.b16 %v429
      %v546 = vunpack.c.l.b16 %v430
      %v547 = vunpack.c.l.b16 %v431
      %v548 = vpack.c.b16 %v545, %v544
      %v549 = vpack.c.b16 %v547, %v546
      %v551 = vsel %vm473, %v548, 0
      %v554 = vsel %vm473, %v549, 0
      %v557 = vsel %vm480, %v432, 0
      %v560 = vsel %vm480, %v433, 0
      %562 = vmatprep.subr.bf16.mxu0 %v560
      %563 = vmatpush1.bf16.msra.mxu0 %v557
      %564 = vmatprep.subr.bf16.mxu0 0
      %565 = vmatpush1.bf16.msra.mxu0 0
      %566 = vmatprep.subr.bf16.mxu0 0
      %567 = vmatpush1.bf16.msra.mxu0 0
      %568 = vmatprep.subr.bf16.mxu0 0
      %569 = vmatpush1.bf16.msra.mxu0 0
      %570 = vmatprep.subr.bf16.mxu0 0
      %571 = vmatpush1.bf16.msra.mxu0 0
      %572 = vmatprep.subr.bf16.mxu0 0
      %573 = vmatpush1.bf16.msra.mxu0 0
      %574 = vmatprep.subr.bf16.mxu0 0
      %575 = vmatpush1.bf16.msra.mxu0 0
      %576 = vmatprep.subr.bf16.mxu0 0
      %577 = vmatpush1.bf16.msra.mxu0 0
      %578 = vmatprep.subr.bf16.mxu0 0
      %579 = vmatpush1.bf16.msra.mxu0 0
      %580 = vmatprep.subr.bf16.mxu0 0
      %581 = vmatpush1.bf16.msra.mxu0 0
      %582 = vmatprep.subr.bf16.mxu0 0
      %583 = vmatpush1.bf16.msra.mxu0 0
      %584 = vmatprep.subr.bf16.mxu0 0
      %585 = vmatpush1.bf16.msra.mxu0 0
      %586 = vmatprep.subr.bf16.mxu0 0
      %587 = vmatpush1.bf16.msra.mxu0 0
      %588 = vmatprep.subr.bf16.mxu0 0
      %589 = vmatpush1.bf16.msra.mxu0 0
      %590 = vmatprep.subr.bf16.mxu0 0
      %591 = vmatpush1.bf16.msra.mxu0 0
      %592 = vmatprep.subr.bf16.mxu0 0
      %593 = vmatpush1.bf16.msra.mxu0 0
      %594 = vmatprep.mubr.bf16.mxu0 0
      %595 = vmatmul.mubr.bf16.gmra.mrb[0].mxu0 %v551
      %v596 = vpop.f32.mrb[0].mxu0
      %v597 = vadd.f32 %v522, %v596
      %v598 = vpop.f32.mrb[0].mxu0
      %v599 = vadd.f32 %v524, %v598
      %v600 = vpop.f32.mrb[0].mxu0
      %v601 = vadd.f32 %v526, %v600
      %v602 = vpop.f32.mrb[0].mxu0
      %v603 = vadd.f32 %v528, %v602
      %604 = vmatprep.mubr.bf16.mxu0 0
      %605 = vmatmul.mubr.bf16.gmra.mrb[0].mxu0 %v554
      %v606 = vpop.f32.mrb[0].mxu0
      %v607 = vadd.f32 %v532, %v606
      %v608 = vpop.f32.mrb[0].mxu0
      %v609 = vadd.f32 %v534, %v608
      %v610 = vpop.f32.mrb[0].mxu0
      %v611 = vadd.f32 %v536, %v610
      %v612 = vpop.f32.mrb[0].mxu0
      %v613 = vadd.f32 %v538, %v612
      %614 = vdwg.mxu0
      %615 = vrot.lane.b32.xlu0 %v401, 15
      %v616 = vpop.permute.xlu0 %615
      %617 = vrot.lane.b32.xlu0 %v403, 15
      %v618 = vpop.permute.xlu0 %617
      %vm619 = vcmp.lt.s32.totalorder %v410, 15
      %v620 = vsel %vm619, %v616, %v618
      %v621 = vsel %vm619, %v618, %v616
      %s622 = scalar_lea.vmem %s1, 4
      %v623 = vld [vmem:[%s622] sm:$0x3]
      %v625 = vlaneseq
      %v626 = vshrl.u32 %v625, 7
      %v627 = vsub.s32 0, %v626
      %v628 = vrot.slane %v623, %v627
      %v629 = vlaneseq
      %v630 = vshrl.u32 %v629, 7
      %v631 = vsub.s32 1, %v630
      %v632 = vrot.slane %v623, %v631
      %v635 = vmul.f32 %v621, %v628
      %v636 = vmul.f32 %v620, %v632
      %s637 = scalar_lea.vmem %s2, 32
      %v638 = vld [vmem:[%s637] sm:$0xf]
      %v639 = vld [vmem:[%s637 + $0x4] sm:$0xf]
      %v640 = vld [vmem:[%s637 + $0x8] sm:$0xf]
      %v641 = vld [vmem:[%s637 + $0xc] sm:$0xf]
      %v642 = vpack.c.bf16 %v635, %v635
      %v643 = vpack.c.bf16 %v636, %v636
      %v648 = vunpack.c.l.b16 %v638
      %v649 = vunpack.c.l.b16 %v639
      %v650 = vunpack.c.l.b16 %v640
      %v651 = vunpack.c.l.b16 %v641
      %v652 = vpack.c.b16 %v649, %v648
      %v653 = vpack.c.b16 %v651, %v650
      %v655 = vsel %vm473, %v652, 0
      %v658 = vsel %vm473, %v653, 0
      %v661 = vsel %vm480, %v642, 0
      %v664 = vsel %vm480, %v643, 0
      %666 = vmatprep.subr.bf16.mxu0 %v664
      %667 = vmatpush1.bf16.msra.mxu0 %v661
      %668 = vmatprep.subr.bf16.mxu0 0
      %669 = vmatpush1.bf16.msra.mxu0 0
      %670 = vmatprep.subr.bf16.mxu0 0
      %671 = vmatpush1.bf16.msra.mxu0 0
      %672 = vmatprep.subr.bf16.mxu0 0
      %673 = vmatpush1.bf16.msra.mxu0 0
      %674 = vmatprep.subr.bf16.mxu0 0
      %675 = vmatpush1.bf16.msra.mxu0 0
      %676 = vmatprep.subr.bf16.mxu0 0
      %677 = vmatpush1.bf16.msra.mxu0 0
      %678 = vmatprep.subr.bf16.mxu0 0
      %679 = vmatpush1.bf16.msra.mxu0 0
      %680 = vmatprep.subr.bf16.mxu0 0
      %681 = vmatpush1.bf16.msra.mxu0 0
      %682 = vmatprep.subr.bf16.mxu0 0
      %683 = vmatpush1.bf16.msra.mxu0 0
      %684 = vmatprep.subr.bf16.mxu0 0
      %685 = vmatpush1.bf16.msra.mxu0 0
      %686 = vmatprep.subr.bf16.mxu0 0
      %687 = vmatpush1.bf16.msra.mxu0 0
      %688 = vmatprep.subr.bf16.mxu0 0
      %689 = vmatpush1.bf16.msra.mxu0 0
      %690 = vmatprep.subr.bf16.mxu0 0
      %691 = vmatpush1.bf16.msra.mxu0 0
      %692 = vmatprep.subr.bf16.mxu0 0
      %693 = vmatpush1.bf16.msra.mxu0 0
      %694 = vmatprep.subr.bf16.mxu0 0
      %695 = vmatpush1.bf16.msra.mxu0 0
      %696 = vmatprep.subr.bf16.mxu0 0
      %697 = vmatpush1.bf16.msra.mxu0 0
      %698 = vmatprep.mubr.bf16.mxu0 0
      %699 = vmatmul.mubr.bf16.gmra.mrb[0].mxu0 %v655
      %v700 = vpop.f32.mrb[0].mxu0
      %v701 = vadd.f32 0.0, %v700
      %v702 = vpop.f32.mrb[0].mxu0
      %v703 = vadd.f32 0.0, %v702
      %v704 = vpop.f32.mrb[0].mxu0
      %v705 = vadd.f32 0.0, %v704
      %v706 = vpop.f32.mrb[0].mxu0
      %v707 = vadd.f32 0.0, %v706
      %708 = vmatprep.mubr.bf16.mxu0 0
      %709 = vmatmul.mubr.bf16.gmra.mrb[0].mxu0 %v658
      %v710 = vpop.f32.mrb[0].mxu0
      %v711 = vadd.f32 0.0, %v710
      %v712 = vpop.f32.mrb[0].mxu0
      %v713 = vadd.f32 0.0, %v712
      %v714 = vpop.f32.mrb[0].mxu0
      %v715 = vadd.f32 0.0, %v714
      %v716 = vpop.f32.mrb[0].mxu0
      %v717 = vadd.f32 0.0, %v716
      %718 = vdwg.mxu0
      %v719 = vadd.f32 %v597, %v701
      %v720 = vadd.f32 %v599, %v703
      %v721 = vadd.f32 %v601, %v705
      %v722 = vadd.f32 %v603, %v707
      %v723 = vadd.f32 %v607, %v711
      %v724 = vadd.f32 %v609, %v713
      %v725 = vadd.f32 %v611, %v715
      %v726 = vadd.f32 %v613, %v717
      %727 = vrot.lane.b32.xlu0 %v401, 1
      %v728 = vpop.permute.xlu0 %727
      %729 = vrot.lane.b32.xlu0 %v403, 1
      %v730 = vpop.permute.xlu0 %729
      %vm731 = vcmp.lt.s32.totalorder %v410, 1
      %v732 = vsel %vm731, %v728, %v730
      %v733 = vsel %vm731, %v730, %v728
      %s734 = scalar_lea.vmem %s1, 6
      %v735 = vld [vmem:[%s734] sm:$0x3]
      %v737 = vlaneseq
      %v738 = vshrl.u32 %v737, 7
      %v739 = vsub.s32 0, %v738
      %v740 = vrot.slane %v735, %v739
      %v741 = vlaneseq
      %v742 = vshrl.u32 %v741, 7
      %v743 = vsub.s32 1, %v742
      %v744 = vrot.slane %v735, %v743
      %v747 = vmul.f32 %v733, %v740
      %v748 = vmul.f32 %v732, %v744
      %s749 = scalar_lea.vmem %s2, 48
      %v750 = vld [vmem:[%s749] sm:$0xf]
      %v751 = vld [vmem:[%s749 + $0x4] sm:$0xf]
      %v752 = vld [vmem:[%s749 + $0x8] sm:$0xf]
      %v753 = vld [vmem:[%s749 + $0xc] sm:$0xf]
      %v754 = vpack.c.bf16 %v747, %v747
      %v755 = vpack.c.bf16 %v748, %v748
      %v760 = vunpack.c.l.b16 %v750
      %v761 = vunpack.c.l.b16 %v751
      %v762 = vunpack.c.l.b16 %v752
      %v763 = vunpack.c.l.b16 %v753
      %v764 = vpack.c.b16 %v761, %v760
      %v765 = vpack.c.b16 %v763, %v762
      %v767 = vsel %vm473, %v764, 0
      %v770 = vsel %vm473, %v765, 0
      %v773 = vsel %vm480, %v754, 0
      %v776 = vsel %vm480, %v755, 0
      %778 = vmatprep.subr.bf16.mxu0 %v776
      %779 = vmatpush1.bf16.msra.mxu0 %v773
      %780 = vmatprep.subr.bf16.mxu0 0
      %781 = vmatpush1.bf16.msra.mxu0 0
      %782 = vmatprep.subr.bf16.mxu0 0
      %783 = vmatpush1.bf16.msra.mxu0 0
      %784 = vmatprep.subr.bf16.mxu0 0
      %785 = vmatpush1.bf16.msra.mxu0 0
      %786 = vmatprep.subr.bf16.mxu0 0
      %787 = vmatpush1.bf16.msra.mxu0 0
      %788 = vmatprep.subr.bf16.mxu0 0
      %789 = vmatpush1.bf16.msra.mxu0 0
      %790 = vmatprep.subr.bf16.mxu0 0
      %791 = vmatpush1.bf16.msra.mxu0 0
      %792 = vmatprep.subr.bf16.mxu0 0
      %793 = vmatpush1.bf16.msra.mxu0 0
      %794 = vmatprep.subr.bf16.mxu0 0
      %795 = vmatpush1.bf16.msra.mxu0 0
      %796 = vmatprep.subr.bf16.mxu0 0
      %797 = vmatpush1.bf16.msra.mxu0 0
      %798 = vmatprep.subr.bf16.mxu0 0
      %799 = vmatpush1.bf16.msra.mxu0 0
      %800 = vmatprep.subr.bf16.mxu0 0
      %801 = vmatpush1.bf16.msra.mxu0 0
      %802 = vmatprep.subr.bf16.mxu0 0
      %803 = vmatpush1.bf16.msra.mxu0 0
      %804 = vmatprep.subr.bf16.mxu0 0
      %805 = vmatpush1.bf16.msra.mxu0 0
      %806 = vmatprep.subr.bf16.mxu0 0
      %807 = vmatpush1.bf16.msra.mxu0 0
      %808 = vmatprep.subr.bf16.mxu0 0
      %809 = vmatpush1.bf16.msra.mxu0 0
      %810 = vmatprep.mubr.bf16.mxu0 0
      %811 = vmatmul.mubr.bf16.gmra.mrb[0].mxu0 %v767
      %v812 = vpop.f32.mrb[0].mxu0
      %v813 = vadd.f32 0.0, %v812
      %v814 = vpop.f32.mrb[0].mxu0
      %v815 = vadd.f32 0.0, %v814
      %v816 = vpop.f32.mrb[0].mxu0
      %v817 = vadd.f32 0.0, %v816
      %v818 = vpop.f32.mrb[0].mxu0
      %v819 = vadd.f32 0.0, %v818
      %820 = vmatprep.mubr.bf16.mxu0 0
      %821 = vmatmul.mubr.bf16.gmra.mrb[0].mxu0 %v770
      %v822 = vpop.f32.mrb[0].mxu0
      %v823 = vadd.f32 0.0, %v822
      %v824 = vpop.f32.mrb[0].mxu0
      %v825 = vadd.f32 0.0, %v824
      %v826 = vpop.f32.mrb[0].mxu0
      %v827 = vadd.f32 0.0, %v826
      %v828 = vpop.f32.mrb[0].mxu0
      %v829 = vadd.f32 0.0, %v828
      %830 = vdwg.mxu0
      %v831 = vadd.f32 %v719, %v813
      %v832 = vadd.f32 %v720, %v815
      %v833 = vadd.f32 %v721, %v817
      %v834 = vadd.f32 %v722, %v819
      %v835 = vadd.f32 %v723, %v823
      %v836 = vadd.f32 %v724, %v825
      %v837 = vadd.f32 %v725, %v827
      %v838 = vadd.f32 %v726, %v829
      %s839 = scalar_lea.vmem %s1, 8
      %v840 = vld [vmem:[%s839] sm:$0x3]
      %v842 = vlaneseq
      %v843 = vshrl.u32 %v842, 7
      %v844 = vsub.s32 0, %v843
      %v845 = vrot.slane %v840, %v844
      %v846 = vlaneseq
      %v847 = vshrl.u32 %v846, 7
      %v848 = vsub.s32 1, %v847
      %v849 = vrot.slane %v840, %v848
      %v850 = vcombine.low %v845, %v849
      %v852 = vmul.f32 %v401, %v850
      %s853 = scalar_lea.vmem %s2, 64
      %v854 = vld [vmem:[%s853] sm:$0xf]
      %v855 = vld [vmem:[%s853 + $0x4] sm:$0xf]
      %v856 = vld [vmem:[%s853 + $0x8] sm:$0xf]
      %v857 = vld [vmem:[%s853 + $0xc] sm:$0xf]
      %v859 = vcombine.high %v852, %v852
      %v861 = vpack.c.bf16 %v852, %v852
      %v862 = vpack.c.bf16 %v859, %v859
      %v867 = vunpack.c.l.b16 %v854
      %v868 = vunpack.c.l.b16 %v855
      %v869 = vunpack.c.l.b16 %v856
      %v870 = vunpack.c.l.b16 %v857
      %v871 = vpack.c.b16 %v868, %v867
      %v872 = vpack.c.b16 %v870, %v869
      %v874 = vsel %vm473, %v871, 0
      %v877 = vsel %vm473, %v872, 0
      %v880 = vsel %vm480, %v861, 0
      %v883 = vsel %vm480, %v862, 0
      %885 = vmatprep.subr.bf16.mxu0 %v883
      %886 = vmatpush1.bf16.msra.mxu0 %v880
      %887 = vmatprep.subr.bf16.mxu0 0
      %888 = vmatpush1.bf16.msra.mxu0 0
      %889 = vmatprep.subr.bf16.mxu0 0
      %890 = vmatpush1.bf16.msra.mxu0 0
      %891 = vmatprep.subr.bf16.mxu0 0
      %892 = vmatpush1.bf16.msra.mxu0 0
      %893 = vmatprep.subr.bf16.mxu0 0
      %894 = vmatpush1.bf16.msra.mxu0 0
      %895 = vmatprep.subr.bf16.mxu0 0
      %896 = vmatpush1.bf16.msra.mxu0 0
      %897 = vmatprep.subr.bf16.mxu0 0
      %898 = vmatpush1.bf16.msra.mxu0 0
      %899 = vmatprep.subr.bf16.mxu0 0
      %900 = vmatpush1.bf16.msra.mxu0 0
      %901 = vmatprep.subr.bf16.mxu0 0
      %902 = vmatpush1.bf16.msra.mxu0 0
      %903 = vmatprep.subr.bf16.mxu0 0
      %904 = vmatpush1.bf16.msra.mxu0 0
      %905 = vmatprep.subr.bf16.mxu0 0
      %906 = vmatpush1.bf16.msra.mxu0 0
      %907 = vmatprep.subr.bf16.mxu0 0
      %908 = vmatpush1.bf16.msra.mxu0 0
      %909 = vmatprep.subr.bf16.mxu0 0
      %910 = vmatpush1.bf16.msra.mxu0 0
      %911 = vmatprep.subr.bf16.mxu0 0
      %912 = vmatpush1.bf16.msra.mxu0 0
      %913 = vmatprep.subr.bf16.mxu0 0
      %914 = vmatpush1.bf16.msra.mxu0 0
      %915 = vmatprep.subr.bf16.mxu0 0
      %916 = vmatpush1.bf16.msra.mxu0 0
      %917 = vmatprep.mubr.bf16.mxu0 0
      %918 = vmatmul.mubr.bf16.gmra.mrb[0].mxu0 %v874
      %v919 = vpop.f32.mrb[0].mxu0
      %v920 = vadd.f32 0.0, %v919
      %v921 = vpop.f32.mrb[0].mxu0
      %v922 = vadd.f32 0.0, %v921
      %v923 = vpop.f32.mrb[0].mxu0
      %v924 = vadd.f32 0.0, %v923
      %v925 = vpop.f32.mrb[0].mxu0
      %v926 = vadd.f32 0.0, %v925
      %927 = vmatprep.mubr.bf16.mxu0 0
      %928 = vmatmul.mubr.bf16.gmra.mrb[0].mxu0 %v877
      %v929 = vpop.f32.mrb[0].mxu0
      %v930 = vadd.f32 0.0, %v929
      %v931 = vpop.f32.mrb[0].mxu0
      %v932 = vadd.f32 0.0, %v931
      %v933 = vpop.f32.mrb[0].mxu0
      %v934 = vadd.f32 0.0, %v933
      %v935 = vpop.f32.mrb[0].mxu0
      %v936 = vadd.f32 0.0, %v935
      %937 = vdwg.mxu0
      %v938 = vadd.f32 %v831, %v920
      %v939 = vadd.f32 %v832, %v922
      %v940 = vadd.f32 %v833, %v924
      %v941 = vadd.f32 %v834, %v926
      %v942 = vadd.f32 %v835, %v930
      %v943 = vadd.f32 %v836, %v932
      %v944 = vadd.f32 %v837, %v934
      %v945 = vadd.f32 %v838, %v936
      %946 = vrot.lane.b32.xlu0 %v401, 127
      %v947 = vpop.permute.xlu0 %946
      %948 = vrot.lane.b32.xlu0 %v403, 127
      %v949 = vpop.permute.xlu0 %948
      %vm950 = vcmp.lt.s32.totalorder %v410, 127
      %v951 = vsel %vm950, %v947, %v949
      %v952 = vsel %vm950, %v949, %v947
      %s953 = scalar_lea.vmem %s1, 10
      %v954 = vld [vmem:[%s953] sm:$0x3]
      %v956 = vlaneseq
      %v957 = vshrl.u32 %v956, 7
      %v958 = vsub.s32 0, %v957
      %v959 = vrot.slane %v954, %v958
      %v960 = vlaneseq
      %v961 = vshrl.u32 %v960, 7
      %v962 = vsub.s32 1, %v961
      %v963 = vrot.slane %v954, %v962
      %v966 = vmul.f32 %v951, %v959
      %v967 = vmul.f32 %v952, %v963
      %s968 = scalar_lea.vmem %s2, 80
      %v969 = vld [vmem:[%s968] sm:$0xf]
      %v970 = vld [vmem:[%s968 + $0x4] sm:$0xf]
      %v971 = vld [vmem:[%s968 + $0x8] sm:$0xf]
      %v972 = vld [vmem:[%s968 + $0xc] sm:$0xf]
      %v973 = vpack.c.bf16 %v966, %v966
      %v974 = vpack.c.bf16 %v967, %v967
      %v979 = vunpack.c.l.b16 %v969
      %v980 = vunpack.c.l.b16 %v970
      %v981 = vunpack.c.l.b16 %v971
      %v982 = vunpack.c.l.b16 %v972
      %v983 = vpack.c.b16 %v980, %v979
      %v984 = vpack.c.b16 %v982, %v981
      %v986 = vsel %vm473, %v983, 0
      %v989 = vsel %vm473, %v984, 0
      %v992 = vsel %vm480, %v973, 0
      %v995 = vsel %vm480, %v974, 0
      %997 = vmatprep.subr.bf16.mxu0 %v995
      %998 = vmatpush1.bf16.msra.mxu0 %v992
      %999 = vmatprep.subr.bf16.mxu0 0
      %1000 = vmatpush1.bf16.msra.mxu0 0
      %1001 = vmatprep.subr.bf16.mxu0 0
      %1002 = vmatpush1.bf16.msra.mxu0 0
      %1003 = vmatprep.subr.bf16.mxu0 0
      %1004 = vmatpush1.bf16.msra.mxu0 0
      %1005 = vmatprep.subr.bf16.mxu0 0
      %1006 = vmatpush1.bf16.msra.mxu0 0
      %1007 = vmatprep.subr.bf16.mxu0 0
      %1008 = vmatpush1.bf16.msra.mxu0 0
      %1009 = vmatprep.subr.bf16.mxu0 0
      %1010 = vmatpush1.bf16.msra.mxu0 0
      %1011 = vmatprep.subr.bf16.mxu0 0
      %1012 = vmatpush1.bf16.msra.mxu0 0
      %1013 = vmatprep.subr.bf16.mxu0 0
      %1014 = vmatpush1.bf16.msra.mxu0 0
      %1015 = vmatprep.subr.bf16.mxu0 0
      %1016 = vmatpush1.bf16.msra.mxu0 0
      %1017 = vmatprep.subr.bf16.mxu0 0
      %1018 = vmatpush1.bf16.msra.mxu0 0
      %1019 = vmatprep.subr.bf16.mxu0 0
      %1020 = vmatpush1.bf16.msra.mxu0 0
      %1021 = vmatprep.subr.bf16.mxu0 0
      %1022 = vmatpush1.bf16.msra.mxu0 0
      %1023 = vmatprep.subr.bf16.mxu0 0
      %1024 = vmatpush1.bf16.msra.mxu0 0
      %1025 = vmatprep.subr.bf16.mxu0 0
      %1026 = vmatpush1.bf16.msra.mxu0 0
      %1027 = vmatprep.subr.bf16.mxu0 0
      %1028 = vmatpush1.bf16.msra.mxu0 0
      %1029 = vmatprep.mubr.bf16.mxu0 0
      %1030 = vmatmul.mubr.bf16.gmra.mrb[0].mxu0 %v986
      %v1031 = vpop.f32.mrb[0].mxu0
      %v1032 = vadd.f32 0.0, %v1031
      %v1033 = vpop.f32.mrb[0].mxu0
      %v1034 = vadd.f32 0.0, %v1033
      %v1035 = vpop.f32.mrb[0].mxu0
      %v1036 = vadd.f32 0.0, %v1035
      %v1037 = vpop.f32.mrb[0].mxu0
      %v1038 = vadd.f32 0.0, %v1037
      %1039 = vmatprep.mubr.bf16.mxu0 0
      %1040 = vmatmul.mubr.bf16.gmra.mrb[0].mxu0 %v989
      %v1041 = vpop.f32.mrb[0].mxu0
      %v1042 = vadd.f32 0.0, %v1041
      %v1043 = vpop.f32.mrb[0].mxu0
      %v1044 = vadd.f32 0.0, %v1043
      %v1045 = vpop.f32.mrb[0].mxu0
      %v1046 = vadd.f32 0.0, %v1045
      %v1047 = vpop.f32.mrb[0].mxu0
      %v1048 = vadd.f32 0.0, %v1047
      %1049 = vdwg.mxu0
      %v1050 = vadd.f32 %v938, %v1032
      %v1051 = vadd.f32 %v939, %v1034
      %v1052 = vadd.f32 %v940, %v1036
      %v1053 = vadd.f32 %v941, %v1038
      %v1054 = vadd.f32 %v942, %v1042
      %v1055 = vadd.f32 %v943, %v1044
      %v1056 = vadd.f32 %v944, %v1046
      %v1057 = vadd.f32 %v945, %v1048
      %1058 = vrot.lane.b32.xlu0 %v401, 113
      %v1059 = vpop.permute.xlu0 %1058
      %1060 = vrot.lane.b32.xlu0 %v403, 113
      %v1061 = vpop.permute.xlu0 %1060
      %vm1062 = vcmp.lt.s32.totalorder %v410, 113
      %v1063 = vsel %vm1062, %v1059, %v1061
      %v1064 = vsel %vm1062, %v1061, %v1059
      %s1065 = scalar_lea.vmem %s1, 12
      %v1066 = vld [vmem:[%s1065] sm:$0x3]
      %v1068 = vlaneseq
      %v1069 = vshrl.u32 %v1068, 7
      %v1070 = vsub.s32 0, %v1069
      %v1071 = vrot.slane %v1066, %v1070
      %v1072 = vlaneseq
      %v1073 = vshrl.u32 %v1072, 7
      %v1074 = vsub.s32 1, %v1073
      %v1075 = vrot.slane %v1066, %v1074
      %v1078 = vmul.f32 %v1063, %v1071
      %v1079 = vmul.f32 %v1064, %v1075
      %s1080 = scalar_lea.vmem %s2, 96
      %v1081 = vld [vmem:[%s1080] sm:$0xf]
      %v1082 = vld [vmem:[%s1080 + $0x4] sm:$0xf]
      %v1083 = vld [vmem:[%s1080 + $0x8] sm:$0xf]
      %v1084 = vld [vmem:[%s1080 + $0xc] sm:$0xf]
      %v1085 = vpack.c.bf16 %v1078, %v1078
      %v1086 = vpack.c.bf16 %v1079, %v1079
      %v1091 = vunpack.c.l.b16 %v1081
      %v1092 = vunpack.c.l.b16 %v1082
      %v1093 = vunpack.c.l.b16 %v1083
      %v1094 = vunpack.c.l.b16 %v1084
      %v1095 = vpack.c.b16 %v1092, %v1091
      %v1096 = vpack.c.b16 %v1094, %v1093
      %v1098 = vsel %vm473, %v1095, 0
      %v1101 = vsel %vm473, %v1096, 0
      %v1104 = vsel %vm480, %v1085, 0
      %v1107 = vsel %vm480, %v1086, 0
      %1109 = vmatprep.subr.bf16.mxu0 %v1107
      %1110 = vmatpush1.bf16.msra.mxu0 %v1104
      %1111 = vmatprep.subr.bf16.mxu0 0
      %1112 = vmatpush1.bf16.msra.mxu0 0
      %1113 = vmatprep.subr.bf16.mxu0 0
      %1114 = vmatpush1.bf16.msra.mxu0 0
      %1115 = vmatprep.subr.bf16.mxu0 0
      %1116 = vmatpush1.bf16.msra.mxu0 0
      %1117 = vmatprep.subr.bf16.mxu0 0
      %1118 = vmatpush1.bf16.msra.mxu0 0
      %1119 = vmatprep.subr.bf16.mxu0 0
      %1120 = vmatpush1.bf16.msra.mxu0 0
      %1121 = vmatprep.subr.bf16.mxu0 0
      %1122 = vmatpush1.bf16.msra.mxu0 0
      %1123 = vmatprep.subr.bf16.mxu0 0
      %1124 = vmatpush1.bf16.msra.mxu0 0
      %1125 = vmatprep.subr.bf16.mxu0 0
      %1126 = vmatpush1.bf16.msra.mxu0 0
      %1127 = vmatprep.subr.bf16.mxu0 0
      %1128 = vmatpush1.bf16.msra.mxu0 0
      %1129 = vmatprep.subr.bf16.mxu0 0
      %1130 = vmatpush1.bf16.msra.mxu0 0
      %1131 = vmatprep.subr.bf16.mxu0 0
      %1132 = vmatpush1.bf16.msra.mxu0 0
      %1133 = vmatprep.subr.bf16.mxu0 0
      %1134 = vmatpush1.bf16.msra.mxu0 0
      %1135 = vmatprep.subr.bf16.mxu0 0
      %1136 = vmatpush1.bf16.msra.mxu0 0
      %1137 = vmatprep.subr.bf16.mxu0 0
      %1138 = vmatpush1.bf16.msra.mxu0 0
      %1139 = vmatprep.subr.bf16.mxu0 0
      %1140 = vmatpush1.bf16.msra.mxu0 0
      %1141 = vmatprep.mubr.bf16.mxu0 0
      %1142 = vmatmul.mubr.bf16.gmra.mrb[0].mxu0 %v1098
      %v1143 = vpop.f32.mrb[0].mxu0
      %v1144 = vadd.f32 0.0, %v1143
      %v1145 = vpop.f32.mrb[0].mxu0
      %v1146 = vadd.f32 0.0, %v1145
      %v1147 = vpop.f32.mrb[0].mxu0
      %v1148 = vadd.f32 0.0, %v1147
      %v1149 = vpop.f32.mrb[0].mxu0
      %v1150 = vadd.f32 0.0, %v1149
      %1151 = vmatprep.mubr.bf16.mxu0 0
      %1152 = vmatmul.mubr.bf16.gmra.mrb[0].mxu0 %v1101
      %v1153 = vpop.f32.mrb[0].mxu0
      %v1154 = vadd.f32 0.0, %v1153
      %v1155 = vpop.f32.mrb[0].mxu0
      %v1156 = vadd.f32 0.0, %v1155
      %v1157 = vpop.f32.mrb[0].mxu0
      %v1158 = vadd.f32 0.0, %v1157
      %v1159 = vpop.f32.mrb[0].mxu0
      %v1160 = vadd.f32 0.0, %v1159
      %1161 = vdwg.mxu0
      %v1162 = vadd.f32 %v1050, %v1144
      %v1163 = vadd.f32 %v1051, %v1146
      %v1164 = vadd.f32 %v1052, %v1148
      %v1165 = vadd.f32 %v1053, %v1150
      %v1166 = vadd.f32 %v1054, %v1154
      %v1167 = vadd.f32 %v1055, %v1156
      %v1168 = vadd.f32 %v1056, %v1158
      %v1169 = vadd.f32 %v1057, %v1160
      %1170 = vrot.lane.b32.xlu0 %v401, 112
      %v1171 = vpop.permute.xlu0 %1170
      %1172 = vrot.lane.b32.xlu0 %v403, 112
      %v1173 = vpop.permute.xlu0 %1172
      %vm1174 = vcmp.lt.s32.totalorder %v410, 112
      %v1175 = vsel %vm1174, %v1171, %v1173
      %v1176 = vsel %vm1174, %v1173, %v1171
      %s1177 = scalar_lea.vmem %s1, 14
      %v1178 = vld [vmem:[%s1177] sm:$0x3]
      %v1180 = vlaneseq
      %v1181 = vshrl.u32 %v1180, 7
      %v1182 = vsub.s32 0, %v1181
      %v1183 = vrot.slane %v1178, %v1182
      %v1184 = vlaneseq
      %v1185 = vshrl.u32 %v1184, 7
      %v1186 = vsub.s32 1, %v1185
      %v1187 = vrot.slane %v1178, %v1186
      %v1190 = vmul.f32 %v1175, %v1183
      %v1191 = vmul.f32 %v1176, %v1187
      %s1192 = scalar_lea.vmem %s2, 112
      %v1193 = vld [vmem:[%s1192] sm:$0xf]
      %v1194 = vld [vmem:[%s1192 + $0x4] sm:$0xf]
      %v1195 = vld [vmem:[%s1192 + $0x8] sm:$0xf]
      %v1196 = vld [vmem:[%s1192 + $0xc] sm:$0xf]
      %v1197 = vpack.c.bf16 %v1190, %v1190
      %v1198 = vpack.c.bf16 %v1191, %v1191
      %v1203 = vunpack.c.l.b16 %v1193
      %v1204 = vunpack.c.l.b16 %v1194
      %v1205 = vunpack.c.l.b16 %v1195
      %v1206 = vunpack.c.l.b16 %v1196
      %v1207 = vpack.c.b16 %v1204, %v1203
      %v1208 = vpack.c.b16 %v1206, %v1205
      %v1210 = vsel %vm473, %v1207, 0
      %v1213 = vsel %vm473, %v1208, 0
      %v1216 = vsel %vm480, %v1197, 0
      %v1219 = vsel %vm480, %v1198, 0
      %1221 = vmatprep.subr.bf16.mxu0 %v1219
      %1222 = vmatpush1.bf16.msra.mxu0 %v1216
      %1223 = vmatprep.subr.bf16.mxu0 0
      %1224 = vmatpush1.bf16.msra.mxu0 0
      %1225 = vmatprep.subr.bf16.mxu0 0
      %1226 = vmatpush1.bf16.msra.mxu0 0
      %1227 = vmatprep.subr.bf16.mxu0 0
      %1228 = vmatpush1.bf16.msra.mxu0 0
      %1229 = vmatprep.subr.bf16.mxu0 0
      %1230 = vmatpush1.bf16.msra.mxu0 0
      %1231 = vmatprep.subr.bf16.mxu0 0
      %1232 = vmatpush1.bf16.msra.mxu0 0
      %1233 = vmatprep.subr.bf16.mxu0 0
      %1234 = vmatpush1.bf16.msra.mxu0 0
      %1235 = vmatprep.subr.bf16.mxu0 0
      %1236 = vmatpush1.bf16.msra.mxu0 0
      %1237 = vmatprep.subr.bf16.mxu0 0
      %1238 = vmatpush1.bf16.msra.mxu0 0
      %1239 = vmatprep.subr.bf16.mxu0 0
      %1240 = vmatpush1.bf16.msra.mxu0 0
      %1241 = vmatprep.subr.bf16.mxu0 0
      %1242 = vmatpush1.bf16.msra.mxu0 0
      %1243 = vmatprep.subr.bf16.mxu0 0
      %1244 = vmatpush1.bf16.msra.mxu0 0
      %1245 = vmatprep.subr.bf16.mxu0 0
      %1246 = vmatpush1.bf16.msra.mxu0 0
      %1247 = vmatprep.subr.bf16.mxu0 0
      %1248 = vmatpush1.bf16.msra.mxu0 0
      %1249 = vmatprep.subr.bf16.mxu0 0
      %1250 = vmatpush1.bf16.msra.mxu0 0
      %1251 = vmatprep.subr.bf16.mxu0 0
      %1252 = vmatpush1.bf16.msra.mxu0 0
      %1253 = vmatprep.mubr.bf16.mxu0 0
      %1254 = vmatmul.mubr.bf16.gmra.mrb[0].mxu0 %v1210
      %v1255 = vpop.f32.mrb[0].mxu0
      %v1256 = vadd.f32 0.0, %v1255
      %v1257 = vpop.f32.mrb[0].mxu0
      %v1258 = vadd.f32 0.0, %v1257
      %v1259 = vpop.f32.mrb[0].mxu0
      %v1260 = vadd.f32 0.0, %v1259
      %v1261 = vpop.f32.mrb[0].mxu0
      %v1262 = vadd.f32 0.0, %v1261
      %1263 = vmatprep.mubr.bf16.mxu0 0
      %1264 = vmatmul.mubr.bf16.gmra.mrb[0].mxu0 %v1213
      %v1265 = vpop.f32.mrb[0].mxu0
      %v1266 = vadd.f32 0.0, %v1265
      %v1267 = vpop.f32.mrb[0].mxu0
      %v1268 = vadd.f32 0.0, %v1267
      %v1269 = vpop.f32.mrb[0].mxu0
      %v1270 = vadd.f32 0.0, %v1269
      %v1271 = vpop.f32.mrb[0].mxu0
      %v1272 = vadd.f32 0.0, %v1271
      %1273 = vdwg.mxu0
      %v1274 = vadd.f32 %v1162, %v1256
      %v1275 = vadd.f32 %v1163, %v1258
      %v1276 = vadd.f32 %v1164, %v1260
      %v1277 = vadd.f32 %v1165, %v1262
      %v1278 = vadd.f32 %v1166, %v1266
      %v1279 = vadd.f32 %v1167, %v1268
      %v1280 = vadd.f32 %v1168, %v1270
      %v1281 = vadd.f32 %v1169, %v1272
      %1282 = vrot.lane.b32.xlu0 %v401, 111
      %v1283 = vpop.permute.xlu0 %1282
      %1284 = vrot.lane.b32.xlu0 %v403, 111
      %v1285 = vpop.permute.xlu0 %1284
      %vm1286 = vcmp.lt.s32.totalorder %v410, 111
      %v1287 = vsel %vm1286, %v1283, %v1285
      %v1288 = vsel %vm1286, %v1285, %v1283
      %s1289 = scalar_lea.vmem %s1, 16
      %v1290 = vld [vmem:[%s1289] sm:$0x3]
      %v1292 = vlaneseq
      %v1293 = vshrl.u32 %v1292, 7
      %v1294 = vsub.s32 0, %v1293
      %v1295 = vrot.slane %v1290, %v1294
      %v1296 = vlaneseq
      %v1297 = vshrl.u32 %v1296, 7
      %v1298 = vsub.s32 1, %v1297
      %v1299 = vrot.slane %v1290, %v1298
      %v1302 = vmul.f32 %v1287, %v1295
      %v1303 = vmul.f32 %v1288, %v1299
      %s1304 = scalar_lea.vmem %s2, 128
      %v1305 = vld [vmem:[%s1304] sm:$0xf]
      %v1306 = vld [vmem:[%s1304 + $0x4] sm:$0xf]
      %v1307 = vld [vmem:[%s1304 + $0x8] sm:$0xf]
      %v1308 = vld [vmem:[%s1304 + $0xc] sm:$0xf]
      %v1309 = vpack.c.bf16 %v1302, %v1302
      %v1310 = vpack.c.bf16 %v1303, %v1303
      %v1315 = vunpack.c.l.b16 %v1305
      %v1316 = vunpack.c.l.b16 %v1306
      %v1317 = vunpack.c.l.b16 %v1307
      %v1318 = vunpack.c.l.b16 %v1308
      %v1319 = vpack.c.b16 %v1316, %v1315
      %v1320 = vpack.c.b16 %v1318, %v1317
      %v1322 = vsel %vm473, %v1319, 0
      %v1325 = vsel %vm473, %v1320, 0
      %v1328 = vsel %vm480, %v1309, 0
      %v1331 = vsel %vm480, %v1310, 0
      %1333 = vmatprep.subr.bf16.mxu0 %v1331
      %1334 = vmatpush1.bf16.msra.mxu0 %v1328
      %1335 = vmatprep.subr.bf16.mxu0 0
      %1336 = vmatpush1.bf16.msra.mxu0 0
      %1337 = vmatprep.subr.bf16.mxu0 0
      %1338 = vmatpush1.bf16.msra.mxu0 0
      %1339 = vmatprep.subr.bf16.mxu0 0
      %1340 = vmatpush1.bf16.msra.mxu0 0
      %1341 = vmatprep.subr.bf16.mxu0 0
      %1342 = vmatpush1.bf16.msra.mxu0 0
      %1343 = vmatprep.subr.bf16.mxu0 0
      %1344 = vmatpush1.bf16.msra.mxu0 0
      %1345 = vmatprep.subr.bf16.mxu0 0
      %1346 = vmatpush1.bf16.msra.mxu0 0
      %1347 = vmatprep.subr.bf16.mxu0 0
      %1348 = vmatpush1.bf16.msra.mxu0 0
      %1349 = vmatprep.subr.bf16.mxu0 0
      %1350 = vmatpush1.bf16.msra.mxu0 0
      %1351 = vmatprep.subr.bf16.mxu0 0
      %1352 = vmatpush1.bf16.msra.mxu0 0
      %1353 = vmatprep.subr.bf16.mxu0 0
      %1354 = vmatpush1.bf16.msra.mxu0 0
      %1355 = vmatprep.subr.bf16.mxu0 0
      %1356 = vmatpush1.bf16.msra.mxu0 0
      %1357 = vmatprep.subr.bf16.mxu0 0
      %1358 = vmatpush1.bf16.msra.mxu0 0
      %1359 = vmatprep.subr.bf16.mxu0 0
      %1360 = vmatpush1.bf16.msra.mxu0 0
      %1361 = vmatprep.subr.bf16.mxu0 0
      %1362 = vmatpush1.bf16.msra.mxu0 0
      %1363 = vmatprep.subr.bf16.mxu0 0
      %1364 = vmatpush1.bf16.msra.mxu0 0
      %1365 = vmatprep.mubr.bf16.mxu0 0
      %1366 = vmatmul.mubr.bf16.gmra.mrb[0].mxu0 %v1322
      %v1367 = vpop.f32.mrb[0].mxu0
      %v1368 = vadd.f32 0.0, %v1367
      %v1369 = vpop.f32.mrb[0].mxu0
      %v1370 = vadd.f32 0.0, %v1369
      %v1371 = vpop.f32.mrb[0].mxu0
      %v1372 = vadd.f32 0.0, %v1371
      %v1373 = vpop.f32.mrb[0].mxu0
      %v1374 = vadd.f32 0.0, %v1373
      %1375 = vmatprep.mubr.bf16.mxu0 0
      %1376 = vmatmul.mubr.bf16.gmra.mrb[0].mxu0 %v1325
      %v1377 = vpop.f32.mrb[0].mxu0
      %v1378 = vadd.f32 0.0, %v1377
      %v1379 = vpop.f32.mrb[0].mxu0
      %v1380 = vadd.f32 0.0, %v1379
      %v1381 = vpop.f32.mrb[0].mxu0
      %v1382 = vadd.f32 0.0, %v1381
      %v1383 = vpop.f32.mrb[0].mxu0
      %v1384 = vadd.f32 0.0, %v1383
      %1385 = vdwg.mxu0
      %v1386 = vadd.f32 %v1274, %v1368
      %v1387 = vadd.f32 %v1275, %v1370
      %v1388 = vadd.f32 %v1276, %v1372
      %v1389 = vadd.f32 %v1277, %v1374
      %v1390 = vadd.f32 %v1278, %v1378
      %v1391 = vadd.f32 %v1279, %v1380
      %v1392 = vadd.f32 %v1280, %v1382
      %v1393 = vadd.f32 %v1281, %v1384
      %v1394 = vld [vmem:[%s3] sm:$0xff]
      %v1395 = vld [vmem:[%s3 + $0x8] sm:$0xff]
      %v1396 = vld [vmem:[%s3 + $0x10] sm:$0xff]
      %v1397 = vld [vmem:[%s3 + $0x18] sm:$0xff]
      %1399 = vset.pattern.permute.xlu0 0
      %1400 = vperm.xlu0 %1399, %v1394
      %v1401 = vpop.permute.xlu0 %1400
      %1404 = vset.pattern.permute.xlu0 0
      %1405 = vperm.xlu0 %1404, %v1395
      %v1406 = vpop.permute.xlu0 %1405
      %1409 = vset.pattern.permute.xlu0 0
      %1410 = vperm.xlu0 %1409, %v1396
      %v1411 = vpop.permute.xlu0 %1410
      %1414 = vset.pattern.permute.xlu0 0
      %1415 = vperm.xlu0 %1414, %v1397
      %v1416 = vpop.permute.xlu0 %1415
      %v1418 = vadd.f32 %v1386, %v1401
      %v1419 = vadd.f32 %v1387, %v1401
      %v1420 = vadd.f32 %v1388, %v1406
      %v1421 = vadd.f32 %v1389, %v1406
      %v1422 = vadd.f32 %v1390, %v1411
      %v1423 = vadd.f32 %v1391, %v1411
      %v1424 = vadd.f32 %v1392, %v1416
      %v1425 = vadd.f32 %v1393, %v1416
      %v1426 = vmax.f32 %v1418, 0.0
      %v1427 = vmax.f32 %v1419, 0.0
      %v1428 = vmax.f32 %v1420, 0.0
      %v1429 = vmax.f32 %v1421, 0.0
      %v1430 = vmax.f32 %v1422, 0.0
      %v1431 = vmax.f32 %v1423, 0.0
      %v1432 = vmax.f32 %v1424, 0.0
      %v1433 = vmax.f32 %v1425, 0.0
      %v1434 = vld [vmem:[%s4] sm:$0xf]
      %v1435 = vld [vmem:[%s4 + $0x4] sm:$0xf]
      %v1436 = vld [vmem:[%s4 + $0x8] sm:$0xf]
      %v1437 = vld [vmem:[%s4 + $0xc] sm:$0xf]
      %v1438 = vpack.c.bf16 %v1428, %v1426
      %v1439 = vpack.c.bf16 %v1429, %v1427
      %v1440 = vpack.c.bf16 %v1432, %v1430
      %v1441 = vpack.c.bf16 %v1433, %v1431
      %v1442 = vld [vmem:[%s5] sm:$0xff]
      %v1443 = vld [vmem:[%s5 + $0x8] sm:$0xff]
      %v1444 = vld [vmem:[%s5 + $0x10] sm:$0xff]
      %v1445 = vld [vmem:[%s5 + $0x18] sm:$0xff]
      %1447 = vset.pattern.permute.xlu0 0
      %1448 = vperm.xlu0 %1447, %v1442
      %v1449 = vpop.permute.xlu0 %1448
      %1452 = vset.pattern.permute.xlu0 0
      %1453 = vperm.xlu0 %1452, %v1443
      %v1454 = vpop.permute.xlu0 %1453
      %1457 = vset.pattern.permute.xlu0 0
      %1458 = vperm.xlu0 %1457, %v1444
      %v1459 = vpop.permute.xlu0 %1458
      %1462 = vset.pattern.permute.xlu0 0
      %1463 = vperm.xlu0 %1462, %v1445
      %v1464 = vpop.permute.xlu0 %1463
      %v1470 = vunpack.c.l.b16 %v1434
      %v1471 = vunpack.c.l.b16 %v1435
      %v1472 = vunpack.c.l.b16 %v1436
      %v1473 = vunpack.c.l.b16 %v1437
      %v1474 = vpack.c.b16 %v1471, %v1470
      %v1475 = vpack.c.b16 %v1473, %v1472
      %vm1476 = vcmask 261120
      %v1478 = vsel %vm1476, %v1474, 0
      %v1481 = vsel %vm1476, %v1475, 0
      %1483 = vmatprep.subr.bf16.mxu0 %v1439
      %1484 = vmatpush1.bf16.msra.mxu0 %v1438
      %1485 = vmatprep.subr.bf16.mxu0 %v1441
      %1486 = vmatpush1.bf16.msra.mxu0 %v1440
      %1487 = vmatprep.subr.bf16.mxu0 0
      %1488 = vmatpush1.bf16.msra.mxu0 0
      %1489 = vmatprep.subr.bf16.mxu0 0
      %1490 = vmatpush1.bf16.msra.mxu0 0
      %1491 = vmatprep.subr.bf16.mxu0 0
      %1492 = vmatpush1.bf16.msra.mxu0 0
      %1493 = vmatprep.subr.bf16.mxu0 0
      %1494 = vmatpush1.bf16.msra.mxu0 0
      %1495 = vmatprep.subr.bf16.mxu0 0
      %1496 = vmatpush1.bf16.msra.mxu0 0
      %1497 = vmatprep.subr.bf16.mxu0 0
      %1498 = vmatpush1.bf16.msra.mxu0 0
      %1499 = vmatprep.subr.bf16.mxu0 0
      %1500 = vmatpush1.bf16.msra.mxu0 0
      %1501 = vmatprep.subr.bf16.mxu0 0
      %1502 = vmatpush1.bf16.msra.mxu0 0
      %1503 = vmatprep.subr.bf16.mxu0 0
      %1504 = vmatpush1.bf16.msra.mxu0 0
      %1505 = vmatprep.subr.bf16.mxu0 0
      %1506 = vmatpush1.bf16.msra.mxu0 0
      %1507 = vmatprep.subr.bf16.mxu0 0
      %1508 = vmatpush1.bf16.msra.mxu0 0
      %1509 = vmatprep.subr.bf16.mxu0 0
      %1510 = vmatpush1.bf16.msra.mxu0 0
      %1511 = vmatprep.subr.bf16.mxu0 0
      %1512 = vmatpush1.bf16.msra.mxu0 0
      %1513 = vmatprep.subr.bf16.mxu0 0
      %1514 = vmatpush1.bf16.msra.mxu0 0
      %1515 = vmatprep.mubr.bf16.mxu0 0
      %1516 = vmatmul.mubr.bf16.gmra.mrb[0].mxu0 %v1478
      %v1517 = vpop.f32.mrb[0].mxu0
      %v1518 = vadd.f32 %v1449, %v1517
      %v1519 = vpop.f32.mrb[0].mxu0
      %v1520 = vadd.f32 %v1449, %v1519
      %v1521 = vpop.f32.mrb[0].mxu0
      %v1522 = vadd.f32 %v1454, %v1521
      %v1523 = vpop.f32.mrb[0].mxu0
      %v1524 = vadd.f32 %v1454, %v1523
      %1525 = vmatprep.mubr.bf16.mxu0 0
      %1526 = vmatmul.mubr.bf16.gmra.mrb[0].mxu0 %v1481
      %v1527 = vpop.f32.mrb[0].mxu0
      %v1528 = vadd.f32 %v1459, %v1527
      %v1529 = vpop.f32.mrb[0].mxu0
      %v1530 = vadd.f32 %v1459, %v1529
      %v1531 = vpop.f32.mrb[0].mxu0
      %v1532 = vadd.f32 %v1464, %v1531
      %v1533 = vpop.f32.mrb[0].mxu0
      %v1534 = vadd.f32 %v1464, %v1533
      %1535 = vdwg.mxu0
      %v1536 = vmax.f32 %v1518, 0.0
      %v1537 = vmax.f32 %v1520, 0.0
      %v1538 = vmax.f32 %v1522, 0.0
      %v1539 = vmax.f32 %v1524, 0.0
      %v1540 = vmax.f32 %v1528, 0.0
      %v1541 = vmax.f32 %v1530, 0.0
      %v1542 = vmax.f32 %v1532, 0.0
      %v1543 = vmax.f32 %v1534, 0.0
      %v1544 = vpack.c.bf16 %v1538, %v1536
      %v1545 = vpack.c.bf16 %v1539, %v1537
      %v1546 = vpack.c.bf16 %v1542, %v1540
      %v1547 = vpack.c.bf16 %v1543, %v1541
      %v1548 = vld [vmem:[%s6] sm:$0xf]
      %v1549 = vld [vmem:[%s6 + $0x4] sm:$0x1]
      %v1550 = vld [vmem:[%s7] sm:$0xff]
      %v1551 = vld [vmem:[%s7 + $0x8] sm:$0x3]
      %1553 = vset.pattern.permute.xlu0 0
      %1554 = vperm.xlu0 %1553, %v1550
      %v1555 = vpop.permute.xlu0 %1554
      %1558 = vset.pattern.permute.xlu0 0
      %1559 = vperm.xlu0 %1558, %v1551
      %v1560 = vpop.permute.xlu0 %1559
      %v1564 = vunpack.c.l.b16 %v1548
      %v1565 = vunpack.c.l.b16 %v1549
      %v1566 = vpack.c.b16 %v1565, %v1564
      %v1568 = vsel %vm1476, %v1566, 0
      %1570 = vmatprep.subr.bf16.mxu0 %v1545
      %1571 = vmatpush1.bf16.msra.mxu0 %v1544
      %1572 = vmatprep.subr.bf16.mxu0 %v1547
      %1573 = vmatpush1.bf16.msra.mxu0 %v1546
      %1574 = vmatprep.subr.bf16.mxu0 0
      %1575 = vmatpush1.bf16.msra.mxu0 0
      %1576 = vmatprep.subr.bf16.mxu0 0
      %1577 = vmatpush1.bf16.msra.mxu0 0
      %1578 = vmatprep.subr.bf16.mxu0 0
      %1579 = vmatpush1.bf16.msra.mxu0 0
      %1580 = vmatprep.subr.bf16.mxu0 0
      %1581 = vmatpush1.bf16.msra.mxu0 0
      %1582 = vmatprep.subr.bf16.mxu0 0
      %1583 = vmatpush1.bf16.msra.mxu0 0
      %1584 = vmatprep.subr.bf16.mxu0 0
      %1585 = vmatpush1.bf16.msra.mxu0 0
      %1586 = vmatprep.subr.bf16.mxu0 0
      %1587 = vmatpush1.bf16.msra.mxu0 0
      %1588 = vmatprep.subr.bf16.mxu0 0
      %1589 = vmatpush1.bf16.msra.mxu0 0
      %1590 = vmatprep.subr.bf16.mxu0 0
      %1591 = vmatpush1.bf16.msra.mxu0 0
      %1592 = vmatprep.subr.bf16.mxu0 0
      %1593 = vmatpush1.bf16.msra.mxu0 0
      %1594 = vmatprep.subr.bf16.mxu0 0
      %1595 = vmatpush1.bf16.msra.mxu0 0
      %1596 = vmatprep.subr.bf16.mxu0 0
      %1597 = vmatpush1.bf16.msra.mxu0 0
      %1598 = vmatprep.subr.bf16.mxu0 0
      %1599 = vmatpush1.bf16.msra.mxu0 0
      %1600 = vmatprep.subr.bf16.mxu0 0
      %1601 = vmatpush1.bf16.msra.mxu0 0
      %1602 = vmatprep.mubr.bf16.mxu0 0
      %1603 = vmatmul.mubr.bf16.gmra.mrb[0].mxu0 %v1568
      %v1604 = vpop.f32.mrb[0].mxu0
      %v1605 = vadd.f32 %v1555, %v1604
      %v1606 = vpop.f32.mrb[0].mxu0
      %v1607 = vadd.f32 %v1555, %v1606
      %v1608 = vpop.f32.mrb[0].mxu0
      %v1609 = vadd.f32 %v1560, %v1608
      %v1610 = vpop.f32.mrb[0].mxu0
      %v1611 = vadd.f32 %v1560, %v1610
      %1612 = vdwg.mxu0
      %v1613 = vsel %vm480, %v1609, -inf
      %v1614 = vmax.f32 %v1605, %v1613
      %v1615 = vrot.slane %v1614, 4
      %v1616 = vmax.f32 %v1614, %v1615
      %v1617 = vrot.slane %v1616, 2
      %v1618 = vmax.f32 %v1616, %v1617
      %v1619 = vrot.slane %v1618, 1
      %v1620 = vmax.f32 %v1618, %v1619
      %v1621 = vsel %vm480, %v1611, -inf
      %v1622 = vmax.f32 %v1607, %v1621
      %v1623 = vrot.slane %v1622, 4
      %v1624 = vmax.f32 %v1622, %v1623
      %v1625 = vrot.slane %v1624, 2
      %v1626 = vmax.f32 %v1624, %v1625
      %v1627 = vrot.slane %v1626, 1
      %v1628 = vmax.f32 %v1626, %v1627
      %v1629 = vsub.f32 %v1605, %v1620
      %v1630 = vsub.f32 %v1607, %v1628
      %v1631 = vsub.f32 %v1609, %v1620
      %v1632 = vsub.f32 %v1611, %v1628
      %v1633 = vmul.f32 %v1629, 1.442695
      %v1634 = vpow.pop %v1633
      %v1635 = vmul.f32 %v1630, 1.442695
      %v1636 = vpow.pop %v1635
      %v1637 = vmul.f32 %v1631, 1.442695
      %v1638 = vpow.pop %v1637
      %v1639 = vmul.f32 %v1632, 1.442695
      %v1640 = vpow.pop %v1639
      %v1641 = vsel %vm480, %v1638, 0.0
      %v1642 = vadd.f32 %v1634, %v1641
      %v1643 = vrot.slane %v1642, 4
      %v1644 = vadd.f32 %v1642, %v1643
      %v1645 = vrot.slane %v1644, 2
      %v1646 = vadd.f32 %v1644, %v1645
      %v1647 = vrot.slane %v1646, 1
      %v1648 = vadd.f32 %v1646, %v1647
      %v1649 = vsel %vm480, %v1640, 0.0
      %v1650 = vadd.f32 %v1636, %v1649
      %v1651 = vrot.slane %v1650, 4
      %v1652 = vadd.f32 %v1650, %v1651
      %v1653 = vrot.slane %v1652, 2
      %v1654 = vadd.f32 %v1652, %v1653
      %v1655 = vrot.slane %v1654, 1
      %v1656 = vadd.f32 %v1654, %v1655
      %v1657 = vlog2.pop %v1648
      %v1658 = vmul.f32 %v1657, 0.6931472
      %v1659 = vlog2.pop %v1656
      %v1660 = vmul.f32 %v1659, 0.6931472
      %v1661 = vsub.f32 %v1629, %v1658
      %v1662 = vsub.f32 %v1630, %v1660
      %v1663 = vsub.f32 %v1631, %v1658
      %v1664 = vsub.f32 %v1632, %v1660
      %v1665 = vpack.c.bf16 %v1663, %v1661
      %v1666 = vpack.c.bf16 %v1664, %v1662
      %v1669 = vunpack.c.l.b16 %v1665
      %v1670 = vunpack.c.l.b16 %v1666
      %v1671 = vunpack.c.h.b16 %v1665
      %v1672 = vunpack.c.h.b16 %v1666
      %v1673 = vpack.c.b16 %v1670, %v1669
      %v1674 = vpack.c.b16 %v1672, %v1671
      %1677 = vst [vmem:[%s395] sm:$0xff] %v1673
      %1678 = vst [vmem:[%s395 + $0x8] sm:$0x11] %v1674
      %v1679 = vld [vmem:[%s8] sm:$0x1]
      %v1680 = vld [vmem:[#allocation2] sm:$0x1]
      %1682 = vset.pattern.permute.xlu0 0
      %1683 = vperm.xlu0 %1682, %v1680
      %v1684 = vpop.permute.xlu0 %1683
      %v1686 = vlaneseq
      %v1687 = vshrl.u32 %v1686, 7
      %v1688 = vsub.s32 0, %v1687
      %v1689 = vrot.slane %v1684, %v1688
      %v1691 = vsel %vm1476, %v1679, 0
      %1693 = vmatprep.subr.bf16.mxu0 %v1545
      %1694 = vmatpush1.bf16.msra.mxu0 %v1544
      %1695 = vmatprep.subr.bf16.mxu0 %v1547
      %1696 = vmatpush1.bf16.msra.mxu0 %v1546
      %1697 = vmatprep.subr.bf16.mxu0 0
      %1698 = vmatpush1.bf16.msra.mxu0 0
      %1699 = vmatprep.subr.bf16.mxu0 0
      %1700 = vmatpush1.bf16.msra.mxu0 0
      %1701 = vmatprep.subr.bf16.mxu0 0
      %1702 = vmatpush1.bf16.msra.mxu0 0
      %1703 = vmatprep.subr.bf16.mxu0 0
      %1704 = vmatpush1.bf16.msra.mxu0 0
      %1705 = vmatprep.subr.bf16.mxu0 0
      %1706 = vmatpush1.bf16.msra.mxu0 0
      %1707 = vmatprep.subr.bf16.mxu0 0
      %1708 = vmatpush1.bf16.msra.mxu0 0
      %1709 = vmatprep.subr.bf16.mxu0 0
      %1710 = vmatpush1.bf16.msra.mxu0 0
      %1711 = vmatprep.subr.bf16.mxu0 0
      %1712 = vmatpush1.bf16.msra.mxu0 0
      %1713 = vmatprep.subr.bf16.mxu0 0
      %1714 = vmatpush1.bf16.msra.mxu0 0
      %1715 = vmatprep.subr.bf16.mxu0 0
      %1716 = vmatpush1.bf16.msra.mxu0 0
      %1717 = vmatprep.subr.bf16.mxu0 0
      %1718 = vmatpush1.bf16.msra.mxu0 0
      %1719 = vmatprep.subr.bf16.mxu0 0
      %1720 = vmatpush1.bf16.msra.mxu0 0
      %1721 = vmatprep.subr.bf16.mxu0 0
      %1722 = vmatpush1.bf16.msra.mxu0 0
      %1723 = vmatprep.subr.bf16.mxu0 0
      %1724 = vmatpush1.bf16.msra.mxu0 0
      %1725 = vmatprep.mubr.bf16.mxu0 0
      %1726 = vmatmul.mubr.bf16.gmra.mrb[0].mxu0 %v1691
      %v1727 = vpop.f32.mrb[0].mxu0
      %v1728 = vadd.f32 %v1689, %v1727
      %v1729 = vpop.f32.mrb[0].mxu0
      %v1730 = vadd.f32 %v1689, %v1729
      %v1731 = vpop.f32.mrb[0].mxu0
      %v1732 = vpop.f32.mrb[0].mxu0
      %1733 = vdwg.mxu0
      %1734 = vrot.lane.b32.xlu0 %v1728, 16
      %v1735 = vpop.permute.xlu0 %1734
      %1736 = vrot.lane.b32.xlu0 %v1730, 16
      %v1737 = vpop.permute.xlu0 %1736
      %v1738 = vsel %vm438, %v1735, %v1737
      %v1739 = vsel %vm438, %v1737, %v1735
      %v1740 = vmax.f32 %v1728, %v1739
      %v1741 = vmax.f32 %v1730, %v1738
      %1742 = vrot.lane.b32.xlu0 %v1740, 32
      %v1743 = vpop.permute.xlu0 %1742
      %1744 = vrot.lane.b32.xlu0 %v1741, 32
      %v1745 = vpop.permute.xlu0 %1744
      %vm1746 = vcmp.lt.s32.totalorder %v410, 32
      %v1747 = vsel %vm1746, %v1743, %v1745
      %v1748 = vsel %vm1746, %v1745, %v1743
      %v1749 = vmax.f32 %v1740, %v1748
      %v1750 = vmax.f32 %v1741, %v1747
      %1751 = vrot.lane.b32.xlu0 %v1749, 64
      %v1752 = vpop.permute.xlu0 %1751
      %1753 = vrot.lane.b32.xlu0 %v1750, 64
      %v1754 = vpop.permute.xlu0 %1753
      %vm1755 = vcmp.lt.s32.totalorder %v410, 64
      %v1756 = vsel %vm1755, %v1752, %v1754
      %v1757 = vsel %vm1755, %v1754, %v1752
      %v1758 = vmax.f32 %v1749, %v1757
      %v1759 = vmax.f32 %v1750, %v1756
      %v1760 = vmax.f32 %v1758, %v1759
      %v1761 = vsub.f32 %v1728, %v1760
      %v1762 = vsub.f32 %v1730, %v1760
      %v1763 = vmul.f32 %v1761, 1.442695
      %v1764 = vpow.pop %v1763
      %v1765 = vmul.f32 %v1762, 1.442695
      %v1766 = vpow.pop %v1765
      %1767 = vrot.lane.b32.xlu0 %v1764, 16
      %v1768 = vpop.permute.xlu0 %1767
      %1769 = vrot.lane.b32.xlu0 %v1766, 16
      %v1770 = vpop.permute.xlu0 %1769
      %v1771 = vsel %vm438, %v1768, %v1770
      %v1772 = vsel %vm438, %v1770, %v1768
      %v1773 = vadd.f32 %v1764, %v1772
      %v1774 = vadd.f32 %v1766, %v1771
      %1775 = vrot.lane.b32.xlu0 %v1773, 32
      %v1776 = vpop.permute.xlu0 %1775
      %1777 = vrot.lane.b32.xlu0 %v1774, 32
      %v1778 = vpop.permute.xlu0 %1777
      %v1779 = vsel %vm1746, %v1776, %v1778
      %v1780 = vsel %vm1746, %v1778, %v1776
      %v1781 = vadd.f32 %v1773, %v1780
      %v1782 = vadd.f32 %v1774, %v1779
      %1783 = vrot.lane.b32.xlu0 %v1781, 64
      %v1784 = vpop.permute.xlu0 %1783
      %1785 = vrot.lane.b32.xlu0 %v1782, 64
      %v1786 = vpop.permute.xlu0 %1785
      %v1787 = vsel %vm1755, %v1784, %v1786
      %v1788 = vsel %vm1755, %v1786, %v1784
      %v1789 = vadd.f32 %v1781, %v1788
      %v1790 = vadd.f32 %v1782, %v1787
      %v1791 = vadd.f32 %v1789, %v1790
      %v1792 = vrcp.pop %v1791
      %v1793 = vmul.f32 %v1764, %v1792
      %v1794 = vmul.f32 %v1766, %v1792
      %v1797 = vcombine.low %v1793, %v1794
      %v1799 = vunpack.c.l.s4 1966171168
      %v1800 = vunpack.c.0.s8 %v1799
      %v1801 = vlaneseq
      %v1802 = vshrl.u32 %v1801, 7
      %v1803 = vsub.s32 %v1800, %v1802
      %v1804 = vrot.slane %v1797, %v1803
      %v1806 = vunpack.c.l.s4 1966171168
      %v1807 = vunpack.c.0.s8 %v1806
      %v1808 = vlaneseq
      %v1809 = vshrl.u32 %v1808, 7
      %v1810 = vsub.s32 %v1807, %v1809
      %v1811 = vrot.slane %v1804, %v1810
      %v1813 = vlaneseq
      %vm1814 = vcmp.ge.s32.totalorder %v1813, 0
      %vm1815 = vcmp.lt.s32.totalorder %v1813, 256
      %vm1816 = vmand %vm1814, %vm1815
      %1817 = vst.msk [vmem:[%s399] sm:$0x3] %vm1816, %v1811
      %p1818 = scmp.lt.s32.totalorder %s25, 1
      %s1819 = scalar_select %p1818, %s25, 1
      %s1820 = smul.addr %s1819, 4
      %s1821 = smul.addr %s1820, 4
      %s1822 = scalar_lea.vmem %s10, %s1821
      %p1823 = scmp.lt.s32.totalorder %s25, 1
      %s1824 = scalar_select %p1823, %s25, 1
      %s1825 = smul.addr %s1824, 2
      %s1826 = scalar_lea.vmem %s11, %s1825
      // Predicated region
      $region61: #{ctc2d_forward_test.1} parent=59 // pred_check
        %p1827 = pneg %p258
      $region62: #{ctc2d_forward_test.1} parent=59 // pred_check_branch
        %1829 = sbr.rel (%p1827) target = $region64
      $region63: #{ctc2d_forward_test.1} parent=59 // pred_region
        _
      $region64: #{ctc2d_forward_test.1} parent=59 // pred_fallthru
        _
      // Predicated region
      $region65: #{ctc2d_forward_test.1} parent=59 // pred_check
        %p1830 = pneg %p284
      $region66: #{ctc2d_forward_test.1} parent=59 // pred_check_branch
        %1832 = sbr.rel (%p1830) target = $region68
      $region67: #{ctc2d_forward_test.1} parent=59 // pred_region
        _
      $region68: #{ctc2d_forward_test.1} parent=59 // pred_fallthru
        _
    $region60: #{ctc2d_forward_test.1} parent=5 // pred_fallthru
      _
    %p1833 = scmp.le.s32.totalorder 2, %s20
    // Predicated region
    $region69: #{ctc2d_forward_test.1} parent=5 // pred_check
      %p1834 = pneg %p1833
    $region70: #{ctc2d_forward_test.1} parent=5 // pred_check_branch
      %1836 = sbr.rel (%p1834) target = $region72
    $region71: #{ctc2d_forward_test.1} parent=5 // pred_region
      %s1837 = ssub.s32 %s20, 2
      // Predicated region
      $region73: #{ctc2d_forward_test.1} parent=71 // pred_check
        %p1838 = pneg %p264
      $region74: #{ctc2d_forward_test.1} parent=71 // pred_check_branch
        %1840 = sbr.rel (%p1838) target = $region76
      $region75: #{ctc2d_forward_test.1} parent=71 // pred_region
        %p1841 = scmp.lt.s32.totalorder %s26, 1
        %s1842 = scalar_select %p1841, %s26, 1
        %s1843 = smul.addr %s1842, 4
        %s1844 = smul.addr %s1843, 4
        %s1845 = scalar_lea.vmem %s10, %s1844
      $region76: #{ctc2d_forward_test.1} parent=71 // pred_fallthru
        _
      // Predicated region
      $region77: #{ctc2d_forward_test.1} parent=71 // pred_check
        %p1846 = pneg %p290
      $region78: #{ctc2d_forward_test.1} parent=71 // pred_check_branch
        %1848 = sbr.rel (%p1846) target = $region80
      $region79: #{ctc2d_forward_test.1} parent=71 // pred_region
        %p1849 = scmp.lt.s32.totalorder %s26, 1
        %s1850 = scalar_select %p1849, %s26, 1
        %s1851 = smul.addr %s1850, 2
        %s1852 = scalar_lea.vmem %s11, %s1851
      $region80: #{ctc2d_forward_test.1} parent=71 // pred_fallthru
        _
    $region72: #{ctc2d_forward_test.1} parent=5 // pred_fallthru
      _
  $region6: #{ctc2d_forward_test.1} parent=0 // loop_footer
    %s24 = sadd.s32 1, %s20
  $region7: #{ctc2d_forward_test.1} parent=0 // loop_footer_branch
    %19 = sbr.rel target = $region3
  $region8: #{ctc2d_forward_test.1} parent=0 // loop_exit
    _

</llo_original>
